<compile_context>
chip_gen: v6e
topology: v6e:2x2x1
jax: 0.10.0
libtpu: 0.0.40
codegen_flags: <defaults>
</compile_context>

<pallas_src>
import jax
import jax.numpy as jnp
from jax.experimental import pallas as pl
from jax.experimental.pallas import tpu as pltpu

LANE = 128


def _round_up(x, m):
    return (x + m - 1) // m * m


def _pad_last(a, target):
    pad = target - a.shape[-1]
    if pad == 0:
        return a
    widths = [(0, 0)] * (a.ndim - 1) + [(0, pad)]
    return jnp.pad(a, widths)


def _pad2d(a, rows, cols):
    return jnp.pad(a, ((0, rows - a.shape[0]), (0, cols - a.shape[1])))


def _fold_bn(gamma, beta, mean, var, eps=1e-5):
    scale = gamma / jnp.sqrt(var + eps)
    bias = beta - mean * scale
    return scale.astype(jnp.float32), bias.astype(jnp.float32)


# ----------------------------- fused kernel ----------------------------------

def _bottleneck_kernel(x_ref, w1_ref, b1_ref, w2_ref, b2_ref, w3_ref, b3_ref,
                       o_ref, t1pad_ref):
    # x_ref:     (1, H, W, Cinp)   f32, one image (channels lane-padded)
    # w1_ref:    (Cinp, C1p)       bf16  (BN1 scale folded into columns)
    # w2_ref:    (9*C1p, C1p)      bf16  (taps concatenated along K, BN2 folded)
    # w3_ref:    (C1p, C4p)        bf16  (BN3 scale folded)
    # b*_ref:    (1, Cp)           f32   folded BN biases
    # t1pad_ref: VMEM scratch (H+2, W+2, C1p) f32 (zero-halo conv2 input)
    _, H, W, Cinp = x_ref.shape
    C1p = w1_ref.shape[1]
    C4p = w3_ref.shape[1]

    # Identity path stays f32; matmul operands are cast to bf16.
    x_f32 = x_ref[0].reshape(H * W, Cinp)
    x_bf = x_f32.astype(jnp.bfloat16)

    # ---- conv1 (1x1) + bn1 + relu -------------------------------------------
    t1 = jnp.dot(x_bf, w1_ref[...], preferred_element_type=jnp.float32)
    t1 = jnp.maximum(t1 + b1_ref[...], 0.0)

    # Zero the halo plane, then write the interior.  Halo rows/cols stay zero,
    # which is exactly conv2's `padding=1` zero padding of its post-ReLU input.
    t1pad_ref[...] = jnp.zeros(t1pad_ref.shape, t1pad_ref.dtype)
    t1pad_ref[pl.ds(1, H), pl.ds(1, W), :] = t1.reshape(H, W, C1p)

    # ---- conv2 (3x3, stride 1) as a single K = 9*C1 bf16 matmul --------------
    taps = [t1pad_ref[pl.ds(ki, H), pl.ds(kj, W), :].reshape(H * W, C1p)
            for ki in range(3) for kj in range(3)]
    im2col = jnp.concatenate(taps, axis=-1).astype(jnp.bfloat16)  # (H*W, 9*C1p)
    t2 = jnp.dot(im2col, w2_ref[...], preferred_element_type=jnp.float32)
    t2 = jnp.maximum(t2 + b2_ref[...], 0.0)

    # ---- conv3 (1x1) + bn3 + residual add + relu -----------------------------
    y = jnp.dot(t2.astype(jnp.bfloat16), w3_ref[...],
                preferred_element_type=jnp.float32)
    y = y + b3_ref[...] + x_f32
    o_ref[0] = jnp.maximum(y, 0.0).reshape(H, W, C4p).astype(o_ref.dtype)


# ----------------------------- wrapper ---------------------------------------

def bottleneck_forward(x_nchw, params, stride=1, padding=1):
    """Pallas Bottleneck.forward, downsample=None path (stride=1, padding=1)."""
    # TODO(synk): optional `downsample` submodule (and hence stride>1) not
    # implemented; with downsample=None PyTorch itself requires stride==1 and
    # in_channels == 4*out_channels for the residual add to be shape-valid.
    N, Cin, H, W = x_nchw.shape
    w1, w2, w3 = params["w1"], params["w2"], params["w3"]  # (Cin,C1),(9,C1,C1),(C1,C4)
    C1, C4 = w1.shape[1], w3.shape[1]
    assert stride == 1 and padding == 1 and Cin == C4

    Cinp = _round_up(Cin, LANE)
    C1p = _round_up(C1, LANE)
    C4p = _round_up(C4, LANE)

    # NCHW -> NHWC, channels zero-padded up to a lane multiple.
    x = jnp.transpose(x_nchw, (0, 2, 3, 1)).astype(jnp.float32)
    x = _pad_last(x, Cinp)

    s1, b1 = _fold_bn(params["bn1_gamma"], params["bn1_beta"],
                      params["bn1_mean"], params["bn1_var"])
    s2, b2 = _fold_bn(params["bn2_gamma"], params["bn2_beta"],
                      params["bn2_mean"], params["bn2_var"])
    s3, b3 = _fold_bn(params["bn3_gamma"], params["bn3_beta"],
                      params["bn3_mean"], params["bn3_var"])

    # Fold BN scale into the conv weight columns (per output channel).
    w1s = w1 * s1[None, :]                         # (Cin, C1)
    w2s = w2 * s2[None, None, :]                   # (9, C1, C1)
    w3s = w3 * s3[None, :]                         # (C1, C4)

    w1p = _pad2d(w1s, Cinp, C1p).astype(jnp.bfloat16)                   # (Cinp, C1p)
    w2cat = jnp.concatenate([_pad2d(w2s[k], C1p, C1p) for k in range(9)],
                            axis=0).astype(jnp.bfloat16)                # (9*C1p, C1p)
    w3p = _pad2d(w3s, C1p, C4p).astype(jnp.bfloat16)                    # (C1p, C4p)

    b1p = _pad_last(b1.reshape(1, -1), C1p)        # padded lanes -> 0
    b2p = _pad_last(b2.reshape(1, -1), C1p)
    b3p = _pad_last(b3.reshape(1, -1), C4p)

    def full2d(a):
        return pl.BlockSpec(a.shape, lambda n: (0, 0))   # resident weights

    out_p = pl.pallas_call(
        _bottleneck_kernel,
        out_shape=jax.ShapeDtypeStruct((N, H, W, C4p), jnp.float32),
        grid=(N,),
        in_specs=[
            pl.BlockSpec((1, H, W, Cinp), lambda n: (n, 0, 0, 0)),
            full2d(w1p), full2d(b1p),
            full2d(w2cat), full2d(b2p),
            full2d(w3p), full2d(b3p),
        ],
        out_specs=pl.BlockSpec((1, H, W, C4p), lambda n: (n, 0, 0, 0)),
        scratch_shapes=[pltpu.VMEM((H + 2, W + 2, C1p), jnp.float32)],
        compiler_params=pltpu.CompilerParams(
            dimension_semantics=("parallel",)),       # megacore split over batch
    )(x, w1p, b1p, w2cat, b2p, w3p, b3p)

    # back to NCHW, dropping the lane padding
    return jnp.transpose(out_p[..., :C4], (0, 3, 1, 2))


# ----------------------------- reference (plain JAX) --------------------------

def _bn_ref(x, p, eps=1e-5):
    g = p["gamma"].reshape(1, -1, 1, 1)
    b = p["beta"].reshape(1, -1, 1, 1)
    m = p["mean"].reshape(1, -1, 1, 1)
    v = p["var"].reshape(1, -1, 1, 1)
    return g * (x - m) / jnp.sqrt(v + eps) + b


def reference_forward(x, w1, bn1, w2, bn2, w3, bn3, stride=1, padding=1):
    def conv(x, w, s, p):
        return jax.lax.conv_general_dilated(
            x, w, window_strides=(s, s), padding=((p, p), (p, p)),
            dimension_numbers=("NCHW", "OIHW", "NCHW"))
    identity = x
    out = jax.nn.relu(_bn_ref(conv(x, w1, 1, 0), bn1))
    out = jax.nn.relu(_bn_ref(conv(out, w2, stride, padding), bn2))
    out = _bn_ref(conv(out, w3, 1, 0), bn3)
    return jax.nn.relu(out + identity)


# ----------------------------- main -------------------------------------------

if __name__ == "__main__":
    key = jax.random.PRNGKey(0)
    N, H, W = 2, 16, 16
    out_channels = 4                       # "out_channels" of the block
    Cin = out_channels * 4                 # expansion=4, identity path needs this
    C4 = out_channels * 4
    stride, padding = 1, 1

    keys = jax.random.split(key, 8)
    x = jax.random.normal(keys[0], (N, Cin, H, W), jnp.float32)

    # Conv weights in PyTorch OIHW layout (deterministic init), no bias.
    w1_oihw = 0.1 * jax.random.normal(keys[1], (out_channels, Cin, 1, 1), jnp.float32)
    w2_oihw = 0.1 * jax.random.normal(keys[2], (out_channels, out_channels, 3, 3), jnp.float32)
    w3_oihw = 0.1 * jax.random.normal(keys[3], (C4, out_channels, 1, 1), jnp.float32)

    def bn_params(k, c):
        k1, k2, k3, k4 = jax.random.split(k, 4)
        return dict(gamma=1.0 + 0.1 * jax.random.normal(k1, (c,), jnp.float32),
                    beta=0.1 * jax.random.normal(k2, (c,), jnp.float32),
                    mean=0.1 * jax.random.normal(k3, (c,), jnp.float32),
                    var=1.0 + 0.5 * jax.random.uniform(k4, (c,), jnp.float32))

    bn1 = bn_params(keys[4], out_channels)
    bn2 = bn_params(keys[5], out_channels)
    bn3 = bn_params(keys[6], C4)

    # Re-layout weights for the kernel (channels-last matmul form).
    params = {
        "w1": jnp.transpose(w1_oihw[:, :, 0, 0], (1, 0)),                  # (Cin, C1)
        "w2": jnp.stack([w2_oihw[:, :, ki, kj].T
                         for ki in range(3) for kj in range(3)], axis=0),  # (9, C1, C1)
        "w3": jnp.transpose(w3_oihw[:, :, 0, 0], (1, 0)),                  # (C1, C4)
        "bn1_gamma": bn1["gamma"], "bn1_beta": bn1["beta"],
        "bn1_mean": bn1["mean"], "bn1_var": bn1["var"],
        "bn2_gamma": bn2["gamma"], "bn2_beta": bn2["beta"],
        "bn2_mean": bn2["mean"], "bn2_var": bn2["var"],
        "bn3_gamma": bn3["gamma"], "bn3_beta": bn3["beta"],
        "bn3_mean": bn3["mean"], "bn3_var": bn3["var"],
    }

    fwd = jax.jit(lambda xx: bottleneck_forward(xx, params, stride, padding))
    out = jax.block_until_ready(fwd(x))

    ref = reference_forward(x, w1_oihw, bn1, w2_oihw, bn2, w3_oihw, bn3,
                            stride, padding)
    assert out.shape == ref.shape == (N, C4, H, W)
    max_err = float(jnp.max(jnp.abs(out - ref)))
    # bf16 matmul operands (f32 accumulate) -> tolerance set for bf16 rounding.
    assert bool(jnp.allclose(out, ref, atol=2e-2, rtol=2e-2)), max_err
    print("KERNEL_OK")
</pallas_src>

<mosaic_0001>
module attributes {stable_mosaic.version = 11 : i64} {
  func.func @_bottleneck_kernel(%arg0: i32, %arg1: memref<1x16x16x128xf32, #tpu.memory_space<vmem>>, %arg2: memref<128x128xbf16, #tpu.memory_space<vmem>>, %arg3: memref<1x128xf32, #tpu.memory_space<vmem>>, %arg4: memref<1152x128xbf16, #tpu.memory_space<vmem>>, %arg5: memref<1x128xf32, #tpu.memory_space<vmem>>, %arg6: memref<128x128xbf16, #tpu.memory_space<vmem>>, %arg7: memref<1x128xf32, #tpu.memory_space<vmem>>, %arg8: memref<1x16x16x128xf32, #tpu.memory_space<vmem>>, %arg9: memref<18x18x128xf32, #tpu.memory_space<vmem>>) attributes {dimension_semantics = [#tpu.dimension_semantics<parallel>], iteration_bounds = array<i64: 2>, scalar_prefetch = 0 : i64, scratch_operands = 1 : i64, tpu.core_type = #tpu.core_type<tc>, window_params = [{transform_indices = @transform_0, window_bounds = array<i64: 1, 16, 16, 128>}, {pipeline_mode = #tpu.pipeline_mode<synchronous>, transform_indices = @transform_1, window_bounds = array<i64: 128, 128>}, {pipeline_mode = #tpu.pipeline_mode<synchronous>, transform_indices = @transform_2, window_bounds = array<i64: 1, 128>}, {pipeline_mode = #tpu.pipeline_mode<synchronous>, transform_indices = @transform_3, window_bounds = array<i64: 1152, 128>}, {pipeline_mode = #tpu.pipeline_mode<synchronous>, transform_indices = @transform_4, window_bounds = array<i64: 1, 128>}, {pipeline_mode = #tpu.pipeline_mode<synchronous>, transform_indices = @transform_5, window_bounds = array<i64: 128, 128>}, {pipeline_mode = #tpu.pipeline_mode<synchronous>, transform_indices = @transform_6, window_bounds = array<i64: 1, 128>}, {transform_indices = @transform_7, window_bounds = array<i64: 1, 16, 16, 128>}]} {
    %c0 = arith.constant 0 : index
    %c0_0 = arith.constant 0 : index
    %c0_1 = arith.constant 0 : index
    %c0_2 = arith.constant 0 : index
    %0 = vector.load %arg1[%c0, %c0_0, %c0_1, %c0_2] : memref<1x16x16x128xf32, #tpu.memory_space<vmem>>, vector<1x16x16x128xf32>
    %1 = vector.shape_cast %0 : vector<1x16x16x128xf32> to vector<16x16x128xf32>
    %2 = vector.shape_cast %1 : vector<16x16x128xf32> to vector<256x128xf32>
    %3 = arith.truncf %2 : vector<256x128xf32> to vector<256x128xbf16>
    %c0_3 = arith.constant 0 : index
    %c0_4 = arith.constant 0 : index
    %4 = vector.load %arg2[%c0_3, %c0_4] : memref<128x128xbf16, #tpu.memory_space<vmem>>, vector<128x128xbf16>
    %cst = arith.constant dense<0.000000e+00> : vector<256x128xf32>
    %5 = tpu.matmul %3, %4, %cst {dimension_numbers = #tpu.dot_dimension_numbers<[1], [0], [0], [1], [0, 0, 1, 1], [], []>} : vector<256x128xbf16>, vector<128x128xbf16>, vector<256x128xf32> -> vector<256x128xf32>
    %c0_5 = arith.constant 0 : index
    %c0_6 = arith.constant 0 : index
    %6 = vector.load %arg3[%c0_5, %c0_6] : memref<1x128xf32, #tpu.memory_space<vmem>>, vector<1x128xf32>
    %7 = vector.broadcast %6 : vector<1x128xf32> to vector<256x128xf32>
    %8 = arith.addf %5, %7 : vector<256x128xf32>
    %cst_7 = arith.constant 0.000000e+00 : f32
    %9 = vector.broadcast %cst_7 : f32 to vector<256x128xf32>
    %10 = arith.maximumf %8, %9 : vector<256x128xf32>
    %cst_8 = arith.constant 0.000000e+00 : f32
    %11 = vector.broadcast %cst_8 : f32 to vector<18x18x128xf32>
    %c0_9 = arith.constant 0 : index
    %c0_10 = arith.constant 0 : index
    %c0_11 = arith.constant 0 : index
    %12 = vector.load %arg9[%c0_9, %c0_10, %c0_11] : memref<18x18x128xf32, #tpu.memory_space<vmem>>, vector<18x18x128xf32>
    tpu.vector_store %arg9[%c0_9, %c0_10, %c0_11], %11 {strides = array<i32>} : memref<18x18x128xf32, #tpu.memory_space<vmem>>, vector<18x18x128xf32>,
    %13 = vector.shape_cast %10 : vector<256x128xf32> to vector<16x16x128xf32>
    %c1 = arith.constant 1 : index
    %c1_12 = arith.constant 1 : index
    %c0_13 = arith.constant 0 : index
    %14 = vector.load %arg9[%c1, %c1_12, %c0_13] : memref<18x18x128xf32, #tpu.memory_space<vmem>>, vector<16x16x128xf32>
    tpu.vector_store %arg9[%c1, %c1_12, %c0_13], %13 {strides = array<i32>} : memref<18x18x128xf32, #tpu.memory_space<vmem>>, vector<16x16x128xf32>,
    %c0_14 = arith.constant 0 : index
    %c0_15 = arith.constant 0 : index
    %c0_16 = arith.constant 0 : index
    %15 = vector.load %arg9[%c0_14, %c0_15, %c0_16] : memref<18x18x128xf32, #tpu.memory_space<vmem>>, vector<16x16x128xf32>
    %16 = vector.shape_cast %15 : vector<16x16x128xf32> to vector<256x128xf32>
    %c0_17 = arith.constant 0 : index
    %c1_18 = arith.constant 1 : index
    %c0_19 = arith.constant 0 : index
    %17 = vector.load %arg9[%c0_17, %c1_18, %c0_19] : memref<18x18x128xf32, #tpu.memory_space<vmem>>, vector<16x16x128xf32>
    %18 = vector.shape_cast %17 : vector<16x16x128xf32> to vector<256x128xf32>
    %c0_20 = arith.constant 0 : index
    %c2 = arith.constant 2 : index
    %c0_21 = arith.constant 0 : index
    %19 = vector.load %arg9[%c0_20, %c2, %c0_21] : memref<18x18x128xf32, #tpu.memory_space<vmem>>, vector<16x16x128xf32>
    %20 = vector.shape_cast %19 : vector<16x16x128xf32> to vector<256x128xf32>
    %c1_22 = arith.constant 1 : index
    %c0_23 = arith.constant 0 : index
    %c0_24 = arith.constant 0 : index
    %21 = vector.load %arg9[%c1_22, %c0_23, %c0_24] : memref<18x18x128xf32, #tpu.memory_space<vmem>>, vector<16x16x128xf32>
    %22 = vector.shape_cast %21 : vector<16x16x128xf32> to vector<256x128xf32>
    %c1_25 = arith.constant 1 : index
    %c1_26 = arith.constant 1 : index
    %c0_27 = arith.constant 0 : index
    %23 = vector.load %arg9[%c1_25, %c1_26, %c0_27] : memref<18x18x128xf32, #tpu.memory_space<vmem>>, vector<16x16x128xf32>
    %24 = vector.shape_cast %23 : vector<16x16x128xf32> to vector<256x128xf32>
    %c1_28 = arith.constant 1 : index
    %c2_29 = arith.constant 2 : index
    %c0_30 = arith.constant 0 : index
    %25 = vector.load %arg9[%c1_28, %c2_29, %c0_30] : memref<18x18x128xf32, #tpu.memory_space<vmem>>, vector<16x16x128xf32>
    %26 = vector.shape_cast %25 : vector<16x16x128xf32> to vector<256x128xf32>
    %c2_31 = arith.constant 2 : index
    %c0_32 = arith.constant 0 : index
    %c0_33 = arith.constant 0 : index
    %27 = vector.load %arg9[%c2_31, %c0_32, %c0_33] : memref<18x18x128xf32, #tpu.memory_space<vmem>>, vector<16x16x128xf32>
    %28 = vector.shape_cast %27 : vector<16x16x128xf32> to vector<256x128xf32>
    %c2_34 = arith.constant 2 : index
    %c1_35 = arith.constant 1 : index
    %c0_36 = arith.constant 0 : index
    %29 = vector.load %arg9[%c2_34, %c1_35, %c0_36] : memref<18x18x128xf32, #tpu.memory_space<vmem>>, vector<16x16x128xf32>
    %30 = vector.shape_cast %29 : vector<16x16x128xf32> to vector<256x128xf32>
    %c2_37 = arith.constant 2 : index
    %c2_38 = arith.constant 2 : index
    %c0_39 = arith.constant 0 : index
    %31 = vector.load %arg9[%c2_37, %c2_38, %c0_39] : memref<18x18x128xf32, #tpu.memory_space<vmem>>, vector<16x16x128xf32>
    %32 = vector.shape_cast %31 : vector<16x16x128xf32> to vector<256x128xf32>
    %33 = tpu.concatenate %16, %18, %20, %22, %24, %26, %28, %30, %32 in 1 : vector<256x128xf32>, vector<256x128xf32>, vector<256x128xf32>, vector<256x128xf32>, vector<256x128xf32>, vector<256x128xf32>, vector<256x128xf32>, vector<256x128xf32>, vector<256x128xf32> -> vector<256x1152xf32>
    %34 = arith.truncf %33 : vector<256x1152xf32> to vector<256x1152xbf16>
    %c0_40 = arith.constant 0 : index
    %c0_41 = arith.constant 0 : index
    %35 = vector.load %arg4[%c0_40, %c0_41] : memref<1152x128xbf16, #tpu.memory_space<vmem>>, vector<1152x128xbf16>
    %cst_42 = arith.constant dense<0.000000e+00> : vector<256x128xf32>
    %36 = tpu.matmul %34, %35, %cst_42 {dimension_numbers = #tpu.dot_dimension_numbers<[1], [0], [0], [1], [0, 0, 1, 1], [], []>} : vector<256x1152xbf16>, vector<1152x128xbf16>, vector<256x128xf32> -> vector<256x128xf32>
    %c0_43 = arith.constant 0 : index
    %c0_44 = arith.constant 0 : index
    %37 = vector.load %arg5[%c0_43, %c0_44] : memref<1x128xf32, #tpu.memory_space<vmem>>, vector<1x128xf32>
    %38 = vector.broadcast %37 : vector<1x128xf32> to vector<256x128xf32>
    %39 = arith.addf %36, %38 : vector<256x128xf32>
    %cst_45 = arith.constant 0.000000e+00 : f32
    %40 = vector.broadcast %cst_45 : f32 to vector<256x128xf32>
    %41 = arith.maximumf %39, %40 : vector<256x128xf32>
    %42 = arith.truncf %41 : vector<256x128xf32> to vector<256x128xbf16>
    %c0_46 = arith.constant 0 : index
    %c0_47 = arith.constant 0 : index
    %43 = vector.load %arg6[%c0_46, %c0_47] : memref<128x128xbf16, #tpu.memory_space<vmem>>, vector<128x128xbf16>
    %cst_48 = arith.constant dense<0.000000e+00> : vector<256x128xf32>
    %44 = tpu.matmul %42, %43, %cst_48 {dimension_numbers = #tpu.dot_dimension_numbers<[1], [0], [0], [1], [0, 0, 1, 1], [], []>} : vector<256x128xbf16>, vector<128x128xbf16>, vector<256x128xf32> -> vector<256x128xf32>
    %c0_49 = arith.constant 0 : index
    %c0_50 = arith.constant 0 : index
    %45 = vector.load %arg7[%c0_49, %c0_50] : memref<1x128xf32, #tpu.memory_space<vmem>>, vector<1x128xf32>
    %46 = vector.broadcast %45 : vector<1x128xf32> to vector<256x128xf32>
    %47 = arith.addf %44, %46 : vector<256x128xf32>
    %48 = arith.addf %47, %2 : vector<256x128xf32>
    %cst_51 = arith.constant 0.000000e+00 : f32
    %49 = vector.broadcast %cst_51 : f32 to vector<256x128xf32>
    %50 = arith.maximumf %48, %49 : vector<256x128xf32>
    %51 = vector.shape_cast %50 : vector<256x128xf32> to vector<16x16x128xf32>
    %c0_52 = arith.constant 0 : index
    %c0_53 = arith.constant 0 : index
    %c0_54 = arith.constant 0 : index
    %c0_55 = arith.constant 0 : index
    %52 = vector.load %arg8[%c0_52, %c0_53, %c0_54, %c0_55] : memref<1x16x16x128xf32, #tpu.memory_space<vmem>>, vector<1x16x16x128xf32>
    %53 = vector.shape_cast %52 : vector<1x16x16x128xf32> to vector<16x16x128xf32>
    %54 = vector.shape_cast %51 : vector<16x16x128xf32> to vector<1x16x16x128xf32>
    tpu.vector_store %arg8[%c0_52, %c0_53, %c0_54, %c0_55], %54 {strides = array<i32>} : memref<1x16x16x128xf32, #tpu.memory_space<vmem>>, vector<1x16x16x128xf32>,
    return
  }
  func.func @transform_0(%arg0: i32) -> (i32, i32, i32, i32) {
    %c0_i32 = arith.constant 0 : i32
    %c0_i32_0 = arith.constant 0 : i32
    %c0_i32_1 = arith.constant 0 : i32
    %c0_i32_2 = arith.constant 0 : i32
    return %arg0, %c0_i32, %c0_i32_0, %c0_i32_1 : i32, i32, i32, i32
  }
  func.func @transform_1(%arg0: i32) -> (i32, i32) {
    %c0_i32 = arith.constant 0 : i32
    %c0_i32_0 = arith.constant 0 : i32
    %c0_i32_1 = arith.constant 0 : i32
    return %c0_i32, %c0_i32_0 : i32, i32
  }
  func.func @transform_2(%arg0: i32) -> (i32, i32) {
    %c0_i32 = arith.constant 0 : i32
    %c0_i32_0 = arith.constant 0 : i32
    %c0_i32_1 = arith.constant 0 : i32
    return %c0_i32, %c0_i32_0 : i32, i32
  }
  func.func @transform_3(%arg0: i32) -> (i32, i32) {
    %c0_i32 = arith.constant 0 : i32
    %c0_i32_0 = arith.constant 0 : i32
    %c0_i32_1 = arith.constant 0 : i32
    return %c0_i32, %c0_i32_0 : i32, i32
  }
  func.func @transform_4(%arg0: i32) -> (i32, i32) {
    %c0_i32 = arith.constant 0 : i32
    %c0_i32_0 = arith.constant 0 : i32
    %c0_i32_1 = arith.constant 0 : i32
    return %c0_i32, %c0_i32_0 : i32, i32
  }
  func.func @transform_5(%arg0: i32) -> (i32, i32) {
    %c0_i32 = arith.constant 0 : i32
    %c0_i32_0 = arith.constant 0 : i32
    %c0_i32_1 = arith.constant 0 : i32
    return %c0_i32, %c0_i32_0 : i32, i32
  }
  func.func @transform_6(%arg0: i32) -> (i32, i32) {
    %c0_i32 = arith.constant 0 : i32
    %c0_i32_0 = arith.constant 0 : i32
    %c0_i32_1 = arith.constant 0 : i32
    return %c0_i32, %c0_i32_0 : i32, i32
  }
  func.func @transform_7(%arg0: i32) -> (i32, i32, i32, i32) {
    %c0_i32 = arith.constant 0 : i32
    %c0_i32_0 = arith.constant 0 : i32
    %c0_i32_1 = arith.constant 0 : i32
    %c0_i32_2 = arith.constant 0 : i32
    return %arg0, %c0_i32, %c0_i32_0, %c0_i32_1 : i32, i32, i32, i32
  }
}

</mosaic_0001>

<llo_original>
// kernel: _lambda_.1
$region0: #{_lambda_.1}
  #allocation0 [shape = 'u32[]', space=smem, size = 0x4, offset = 0x4, fixed_abs, tag = 'smem constant byte address 0x4 - core index']
  #allocation1 [shape = 'u32[144,128]{1,0:T(1,128)}', space=vmem, size = 0x12000, scoped, tag = 'internal scratch']
  #allocation2 [shape = 'f32[18,18,128]{2,1,0:T(8,128)}', space=vmem, size = 0x36000, scoped, tag = 'scratch operand']
  %s0 = inlined_call_operand.vmem [shape: f32[2,16,16,128], index: 0, kind: input, shape index: {}]
  %s1 = inlined_call_operand.vmem [shape: bf16[128,128], index: 1, kind: input, shape index: {}]
  %s2 = inlined_call_operand.vmem [shape: f32[1,128], index: 2, kind: input, shape index: {}]
  %s3 = inlined_call_operand.vmem [shape: bf16[1152,128], index: 3, kind: input, shape index: {}]
  %s4 = inlined_call_operand.vmem [shape: f32[1,128], index: 4, kind: input, shape index: {}]
  %s5 = inlined_call_operand.vmem [shape: bf16[128,128], index: 5, kind: input, shape index: {}]
  %s6 = inlined_call_operand.vmem [shape: f32[1,128], index: 6, kind: input, shape index: {}]
  %s7 = inlined_call_operand.vmem [shape: f32[2,16,16,128], index: 7, kind: output, shape index: {}]
  %s8 = sld [smem:[#allocation0]]
  $region61: #{_lambda_.1} parent=0
    _
  %s10 = ssub.s32 1, %s8
  %s11 = scalar_select 0, %s10, %s8
  loop: start=0, step=1, limit=4
  $region2: #{_lambda_.1} parent=0 // loop_pre_header
    _
  $region3: #{_lambda_.1} parent=0 // loop_header
    %s13 = sphi 0, %s17
    %p14 = scmp.ge.s32.totalorder %s13, 4
    %s23 = sphi 0, %s25
    %s26 = sphi 0, %s23
    %s27 = sphi 0, %s26
    %s43 = sphi 0, %s27
    %s47 = sphi 0, %s47
    %s49 = sphi 0, %s47
    %s50 = sphi 0, %s49
    %s64 = sphi 0, %s50
    %s68 = sphi 0, %s68
    %s70 = sphi 0, %s68
    %s71 = sphi 0, %s70
    %s85 = sphi 0, %s71
    %s89 = sphi 0, %s89
    %s91 = sphi 0, %s89
    %s92 = sphi 0, %s91
    %s106 = sphi 0, %s92
    %s110 = sphi 0, %s110
    %s112 = sphi 0, %s110
    %s113 = sphi 0, %s112
    %s127 = sphi 0, %s113
    %s131 = sphi 0, %s131
    %s133 = sphi 0, %s131
    %s134 = sphi 0, %s133
    %s148 = sphi 0, %s134
    %s152 = sphi 0, %s152
    %s154 = sphi 0, %s152
    %s155 = sphi 0, %s154
    %s169 = sphi 0, %s155
    %s175 = sphi 0, %s177
    %s178 = sphi 0, %s175
    %s179 = sphi 0, %s178
    %s195 = sphi 0, %s179
  $region4: #{_lambda_.1} parent=0 // loop_header_branch
    %16 = sbr.rel (%p14) target = $region8
  $region5: #{_lambda_.1} parent=0 // loop_body
    %s18 = ssub.s32 %s13, 1
    %s19 = ssub.s32 %s13, 2
    %s20 = sadd.s32 %s13, 1
    %s21 = ssub.s32 %s13, %s20
    %p22 = scmp.eq.s32.totalorder %s21, 0
    %s24 = sadd.s32 %s23, 1
    %s25 = scalar_select %p22, %s23, %s24
    %p28 = pneg %p22
    %p29 = scmp.eq.s32.totalorder %s13, 1
    %p30 = por %p28, %p29
    %p31 = scmp.ne.s32.totalorder %s23, %s26
    %p32 = scmp.eq.s32.totalorder %s13, 0
    %p33 = por %p31, %p32
    %p34 = scmp.ne.s32.totalorder %s23, %s26
    %p35 = scmp.eq.s32.totalorder %s18, 1
    %p36 = por %p34, %p35
    %p37 = scmp.ne.s32.totalorder %s26, %s27
    %p38 = scmp.eq.s32.totalorder %s18, 0
    %p39 = por %p37, %p38
    %p40 = scmp.ne.s32.totalorder %s26, %s27
    %p41 = scmp.eq.s32.totalorder %s19, 1
    %p42 = por %p40, %p41
    %p44 = scmp.ne.s32.totalorder %s27, %s43
    %p45 = scmp.eq.s32.totalorder %s19, 0
    %p46 = por %p44, %p45
    %s48 = sadd.s32 %s47, 1
    %p51 = scmp.eq.s32.totalorder %s13, 1
    %p52 = scmp.ne.s32.totalorder %s47, %s49
    %p53 = scmp.eq.s32.totalorder %s13, 0
    %p54 = por %p52, %p53
    %p55 = scmp.ne.s32.totalorder %s47, %s49
    %p56 = scmp.eq.s32.totalorder %s18, 1
    %p57 = por %p55, %p56
    %p58 = scmp.ne.s32.totalorder %s49, %s50
    %p59 = scmp.eq.s32.totalorder %s18, 0
    %p60 = por %p58, %p59
    %p61 = scmp.ne.s32.totalorder %s49, %s50
    %p62 = scmp.eq.s32.totalorder %s19, 1
    %p63 = por %p61, %p62
    %p65 = scmp.ne.s32.totalorder %s50, %s64
    %p66 = scmp.eq.s32.totalorder %s19, 0
    %p67 = por %p65, %p66
    %s69 = sadd.s32 %s68, 1
    %p72 = scmp.eq.s32.totalorder %s13, 1
    %p73 = scmp.ne.s32.totalorder %s68, %s70
    %p74 = scmp.eq.s32.totalorder %s13, 0
    %p75 = por %p73, %p74
    %p76 = scmp.ne.s32.totalorder %s68, %s70
    %p77 = scmp.eq.s32.totalorder %s18, 1
    %p78 = por %p76, %p77
    %p79 = scmp.ne.s32.totalorder %s70, %s71
    %p80 = scmp.eq.s32.totalorder %s18, 0
    %p81 = por %p79, %p80
    %p82 = scmp.ne.s32.totalorder %s70, %s71
    %p83 = scmp.eq.s32.totalorder %s19, 1
    %p84 = por %p82, %p83
    %p86 = scmp.ne.s32.totalorder %s71, %s85
    %p87 = scmp.eq.s32.totalorder %s19, 0
    %p88 = por %p86, %p87
    %s90 = sadd.s32 %s89, 1
    %p93 = scmp.eq.s32.totalorder %s13, 1
    %p94 = scmp.ne.s32.totalorder %s89, %s91
    %p95 = scmp.eq.s32.totalorder %s13, 0
    %p96 = por %p94, %p95
    %p97 = scmp.ne.s32.totalorder %s89, %s91
    %p98 = scmp.eq.s32.totalorder %s18, 1
    %p99 = por %p97, %p98
    %p100 = scmp.ne.s32.totalorder %s91, %s92
    %p101 = scmp.eq.s32.totalorder %s18, 0
    %p102 = por %p100, %p101
    %p103 = scmp.ne.s32.totalorder %s91, %s92
    %p104 = scmp.eq.s32.totalorder %s19, 1
    %p105 = por %p103, %p104
    %p107 = scmp.ne.s32.totalorder %s92, %s106
    %p108 = scmp.eq.s32.totalorder %s19, 0
    %p109 = por %p107, %p108
    %s111 = sadd.s32 %s110, 1
    %p114 = scmp.eq.s32.totalorder %s13, 1
    %p115 = scmp.ne.s32.totalorder %s110, %s112
    %p116 = scmp.eq.s32.totalorder %s13, 0
    %p117 = por %p115, %p116
    %p118 = scmp.ne.s32.totalorder %s110, %s112
    %p119 = scmp.eq.s32.totalorder %s18, 1
    %p120 = por %p118, %p119
    %p121 = scmp.ne.s32.totalorder %s112, %s113
    %p122 = scmp.eq.s32.totalorder %s18, 0
    %p123 = por %p121, %p122
    %p124 = scmp.ne.s32.totalorder %s112, %s113
    %p125 = scmp.eq.s32.totalorder %s19, 1
    %p126 = por %p124, %p125
    %p128 = scmp.ne.s32.totalorder %s113, %s127
    %p129 = scmp.eq.s32.totalorder %s19, 0
    %p130 = por %p128, %p129
    %s132 = sadd.s32 %s131, 1
    %p135 = scmp.eq.s32.totalorder %s13, 1
    %p136 = scmp.ne.s32.totalorder %s131, %s133
    %p137 = scmp.eq.s32.totalorder %s13, 0
    %p138 = por %p136, %p137
    %p139 = scmp.ne.s32.totalorder %s131, %s133
    %p140 = scmp.eq.s32.totalorder %s18, 1
    %p141 = por %p139, %p140
    %p142 = scmp.ne.s32.totalorder %s133, %s134
    %p143 = scmp.eq.s32.totalorder %s18, 0
    %p144 = por %p142, %p143
    %p145 = scmp.ne.s32.totalorder %s133, %s134
    %p146 = scmp.eq.s32.totalorder %s19, 1
    %p147 = por %p145, %p146
    %p149 = scmp.ne.s32.totalorder %s134, %s148
    %p150 = scmp.eq.s32.totalorder %s19, 0
    %p151 = por %p149, %p150
    %s153 = sadd.s32 %s152, 1
    %p156 = scmp.eq.s32.totalorder %s13, 1
    %p157 = scmp.ne.s32.totalorder %s152, %s154
    %p158 = scmp.eq.s32.totalorder %s13, 0
    %p159 = por %p157, %p158
    %p160 = scmp.ne.s32.totalorder %s152, %s154
    %p161 = scmp.eq.s32.totalorder %s18, 1
    %p162 = por %p160, %p161
    %p163 = scmp.ne.s32.totalorder %s154, %s155
    %p164 = scmp.eq.s32.totalorder %s18, 0
    %p165 = por %p163, %p164
    %p166 = scmp.ne.s32.totalorder %s154, %s155
    %p167 = scmp.eq.s32.totalorder %s19, 1
    %p168 = por %p166, %p167
    %p170 = scmp.ne.s32.totalorder %s155, %s169
    %p171 = scmp.eq.s32.totalorder %s19, 0
    %p172 = por %p170, %p171
    %s173 = ssub.s32 %s13, %s20
    %p174 = scmp.eq.s32.totalorder %s173, 0
    %s176 = sadd.s32 %s175, 1
    %s177 = scalar_select %p174, %s175, %s176
    %p180 = pneg %p174
    %p181 = scmp.eq.s32.totalorder %s13, 1
    %p182 = por %p180, %p181
    %p183 = scmp.ne.s32.totalorder %s175, %s178
    %p184 = scmp.eq.s32.totalorder %s13, 0
    %p185 = por %p183, %p184
    %p186 = scmp.ne.s32.totalorder %s175, %s178
    %p187 = scmp.eq.s32.totalorder %s18, 1
    %p188 = por %p186, %p187
    %p189 = scmp.ne.s32.totalorder %s178, %s179
    %p190 = scmp.eq.s32.totalorder %s18, 0
    %p191 = por %p189, %p190
    %p192 = scmp.ne.s32.totalorder %s178, %s179
    %p193 = scmp.eq.s32.totalorder %s19, 1
    %p194 = por %p192, %p193
    %p196 = scmp.ne.s32.totalorder %s179, %s195
    %p197 = scmp.eq.s32.totalorder %s19, 0
    %p198 = por %p196, %p197
    %p199 = scmp.le.s32.totalorder 1, %s13
    %p200 = scmp.lt.s32.totalorder %s13, 3
    %p201 = pnand %p199, %p200
    %p202 = pneg %p201
    // Predicated region
    $region9: #{_lambda_.1} parent=5 // pred_check
      _
    $region10: #{_lambda_.1} parent=5 // pred_check_branch
      %204 = sbr.rel (%p201) target = $region12
    $region11: #{_lambda_.1} parent=5 // pred_region
      %s205 = ssub.s32 %s13, 1
      // Predicated region
      $region13: #{_lambda_.1} parent=11 // pred_check
        %p206 = pneg %p60
      $region14: #{_lambda_.1} parent=11 // pred_check_branch
        %208 = sbr.rel (%p206) target = $region16
      $region15: #{_lambda_.1} parent=11 // pred_region
        _
      $region16: #{_lambda_.1} parent=11 // pred_fallthru
        _
      // Predicated region
      $region17: #{_lambda_.1} parent=11 // pred_check
        %p209 = pneg %p81
      $region18: #{_lambda_.1} parent=11 // pred_check_branch
        %211 = sbr.rel (%p209) target = $region20
      $region19: #{_lambda_.1} parent=11 // pred_region
        _
      $region20: #{_lambda_.1} parent=11 // pred_fallthru
        _
      // Predicated region
      $region21: #{_lambda_.1} parent=11 // pred_check
        %p212 = pneg %p102
      $region22: #{_lambda_.1} parent=11 // pred_check_branch
        %214 = sbr.rel (%p212) target = $region24
      $region23: #{_lambda_.1} parent=11 // pred_region
        _
      $region24: #{_lambda_.1} parent=11 // pred_fallthru
        _
      // Predicated region
      $region25: #{_lambda_.1} parent=11 // pred_check
        %p215 = pneg %p123
      $region26: #{_lambda_.1} parent=11 // pred_check_branch
        %217 = sbr.rel (%p215) target = $region28
      $region27: #{_lambda_.1} parent=11 // pred_region
        _
      $region28: #{_lambda_.1} parent=11 // pred_fallthru
        _
      // Predicated region
      $region29: #{_lambda_.1} parent=11 // pred_check
        %p218 = pneg %p144
      $region30: #{_lambda_.1} parent=11 // pred_check_branch
        %220 = sbr.rel (%p218) target = $region32
      $region31: #{_lambda_.1} parent=11 // pred_region
        _
      $region32: #{_lambda_.1} parent=11 // pred_fallthru
        _
      // Predicated region
      $region33: #{_lambda_.1} parent=11 // pred_check
        %p221 = pneg %p165
      $region34: #{_lambda_.1} parent=11 // pred_check_branch
        %223 = sbr.rel (%p221) target = $region36
      $region35: #{_lambda_.1} parent=11 // pred_region
        _
      $region36: #{_lambda_.1} parent=11 // pred_fallthru
        _
    $region12: #{_lambda_.1} parent=5 // pred_fallthru
      _
    %p224 = scmp.lt.s32.totalorder %s13, 2
    // Predicated region
    $region37: #{_lambda_.1} parent=5 // pred_check
      %p225 = pneg %p224
    $region38: #{_lambda_.1} parent=5 // pred_check_branch
      %227 = sbr.rel (%p225) target = $region40
    $region39: #{_lambda_.1} parent=5 // pred_region
      // Predicated region
      $region41: #{_lambda_.1} parent=39 // pred_check
        %p228 = pneg %p33
      $region42: #{_lambda_.1} parent=39 // pred_check_branch
        %230 = sbr.rel (%p228) target = $region44
      $region43: #{_lambda_.1} parent=39 // pred_region
        %p231 = scmp.lt.s32.totalorder %s13, 1
        %s232 = scalar_select %p231, %s13, 1
        %s233 = smul.addr %s232, 32
        %s234 = smul.addr %s233, 8
        %s235 = scalar_lea.vmem %s0, %s234
      $region44: #{_lambda_.1} parent=39 // pred_fallthru
        _
    $region40: #{_lambda_.1} parent=5 // pred_fallthru
      _
    %p236 = scmp.le.s32.totalorder 1, %s13
    %p237 = scmp.lt.s32.totalorder %s13, 3
    %p238 = pnand %p236, %p237
    %p239 = pneg %p238
    // Predicated region
    $region45: #{_lambda_.1} parent=5 // pred_check
      _
    $region46: #{_lambda_.1} parent=5 // pred_check_branch
      %241 = sbr.rel (%p238) target = $region48
    $region47: #{_lambda_.1} parent=5 // pred_region
      %s242 = ssub.s32 %s13, 1
      %p243 = scmp.lt.s32.totalorder %s18, 1
      %s244 = scalar_select %p243, %s18, 1
      %s245 = smul.addr %s244, 32
      %s246 = smul.addr %s245, 8
      %s247 = scalar_lea.vmem %s0, %s246
      %p248 = pneg %p39
      %p249 = pneg %p36
      %p250 = pneg %p60
      %p251 = pneg %p57
      %p252 = pneg %p81
      %p253 = pneg %p78
      %p254 = pneg %p102
      %p255 = pneg %p99
      %p256 = pneg %p123
      %p257 = pneg %p120
      %p258 = pneg %p144
      %p259 = pneg %p141
      %p260 = pneg %p165
      %p261 = pneg %p162
      %p262 = pneg %p191
      %p263 = pneg %p188
      %p264 = scmp.lt.s32.totalorder %s18, 1
      %s265 = scalar_select %p264, %s18, 1
      %s266 = smul.addr %s265, 32
      %s267 = smul.addr %s266, 8
      %s268 = scalar_lea.vmem %s7, %s267
      %p269 = scmp.lt.s32.totalorder %s18, 1
      %s270 = scalar_select %p269, %s18, 1
      %s271 = smul.addr %s270, 32
      %s272 = smul.addr %s271, 8
      %s273 = scalar_lea.vmem %s0, %s272
      %p274 = scmp.lt.s32.totalorder %s18, 1
      %s275 = scalar_select %p274, %s18, 1
      %s276 = smul.addr %s275, 32
      %s277 = smul.addr %s276, 8
      %s278 = scalar_lea.vmem %s7, %s277
      %v280 = vld [vmem:[%s273] sm:$0xff]
      %v281 = vld [vmem:[%s273 + $0x8] sm:$0xff]
      %v282 = vld [vmem:[%s273 + $0x10] sm:$0xff]
      %v283 = vld [vmem:[%s273 + $0x18] sm:$0xff]
      %v284 = vld [vmem:[%s273 + $0x20] sm:$0xff]
      %v285 = vld [vmem:[%s273 + $0x28] sm:$0xff]
      %v286 = vld [vmem:[%s273 + $0x30] sm:$0xff]
      %v287 = vld [vmem:[%s273 + $0x38] sm:$0xff]
      %v288 = vld [vmem:[%s273 + $0x40] sm:$0xff]
      %v289 = vld [vmem:[%s273 + $0x48] sm:$0xff]
      %v290 = vld [vmem:[%s273 + $0x50] sm:$0xff]
      %v291 = vld [vmem:[%s273 + $0x58] sm:$0xff]
      %v292 = vld [vmem:[%s273 + $0x60] sm:$0xff]
      %v293 = vld [vmem:[%s273 + $0x68] sm:$0xff]
      %v294 = vld [vmem:[%s273 + $0x70] sm:$0xff]
      %v295 = vld [vmem:[%s273 + $0x78] sm:$0xff]
      %v296 = vld [vmem:[%s273 + $0x80] sm:$0xff]
      %v297 = vld [vmem:[%s273 + $0x88] sm:$0xff]
      %v298 = vld [vmem:[%s273 + $0x90] sm:$0xff]
      %v299 = vld [vmem:[%s273 + $0x98] sm:$0xff]
      %v300 = vld [vmem:[%s273 + $0xa0] sm:$0xff]
      %v301 = vld [vmem:[%s273 + $0xa8] sm:$0xff]
      %v302 = vld [vmem:[%s273 + $0xb0] sm:$0xff]
      %v303 = vld [vmem:[%s273 + $0xb8] sm:$0xff]
      %v304 = vld [vmem:[%s273 + $0xc0] sm:$0xff]
      %v305 = vld [vmem:[%s273 + $0xc8] sm:$0xff]
      %v306 = vld [vmem:[%s273 + $0xd0] sm:$0xff]
      %v307 = vld [vmem:[%s273 + $0xd8] sm:$0xff]
      %v308 = vld [vmem:[%s273 + $0xe0] sm:$0xff]
      %v309 = vld [vmem:[%s273 + $0xe8] sm:$0xff]
      %v310 = vld [vmem:[%s273 + $0xf0] sm:$0xff]
      %v311 = vld [vmem:[%s273 + $0xf8] sm:$0xff]
      %v312 = vpack.c.bf16 %v281, %v280
      %v313 = vpack.c.bf16 %v283, %v282
      %v314 = vpack.c.bf16 %v285, %v284
      %v315 = vpack.c.bf16 %v287, %v286
      %v316 = vpack.c.bf16 %v289, %v288
      %v317 = vpack.c.bf16 %v291, %v290
      %v318 = vpack.c.bf16 %v293, %v292
      %v319 = vpack.c.bf16 %v295, %v294
      %v320 = vpack.c.bf16 %v297, %v296
      %v321 = vpack.c.bf16 %v299, %v298
      %v322 = vpack.c.bf16 %v301, %v300
      %v323 = vpack.c.bf16 %v303, %v302
      %v324 = vpack.c.bf16 %v305, %v304
      %v325 = vpack.c.bf16 %v307, %v306
      %v326 = vpack.c.bf16 %v309, %v308
      %v327 = vpack.c.bf16 %v311, %v310
      %v328 = vld [vmem:[%s1] sm:$0xf]
      %v329 = vld [vmem:[%s1 + $0x4] sm:$0xf]
      %v330 = vld [vmem:[%s1 + $0x8] sm:$0xf]
      %v331 = vld [vmem:[%s1 + $0xc] sm:$0xf]
      %v332 = vld [vmem:[%s1 + $0x10] sm:$0xf]
      %v333 = vld [vmem:[%s1 + $0x14] sm:$0xf]
      %v334 = vld [vmem:[%s1 + $0x18] sm:$0xf]
      %v335 = vld [vmem:[%s1 + $0x1c] sm:$0xf]
      %v336 = vld [vmem:[%s1 + $0x20] sm:$0xf]
      %v337 = vld [vmem:[%s1 + $0x24] sm:$0xf]
      %v338 = vld [vmem:[%s1 + $0x28] sm:$0xf]
      %v339 = vld [vmem:[%s1 + $0x2c] sm:$0xf]
      %v340 = vld [vmem:[%s1 + $0x30] sm:$0xf]
      %v341 = vld [vmem:[%s1 + $0x34] sm:$0xf]
      %v342 = vld [vmem:[%s1 + $0x38] sm:$0xf]
      %v343 = vld [vmem:[%s1 + $0x3c] sm:$0xf]
      %v344 = vld [vmem:[%s2] sm:$0x1]
      %v346 = vlaneseq
      %v347 = vshrl.u32 %v346, 7
      %v348 = vsub.s32 0, %v347
      %v349 = vrot.slane %v344, %v348
      %v367 = vunpack.c.l.b16 %v328
      %v368 = vunpack.c.l.b16 %v329
      %v369 = vunpack.c.l.b16 %v330
      %v370 = vunpack.c.l.b16 %v331
      %v371 = vunpack.c.l.b16 %v332
      %v372 = vunpack.c.l.b16 %v333
      %v373 = vunpack.c.l.b16 %v334
      %v374 = vunpack.c.l.b16 %v335
      %v375 = vunpack.c.l.b16 %v336
      %v376 = vunpack.c.l.b16 %v337
      %v377 = vunpack.c.l.b16 %v338
      %v378 = vunpack.c.l.b16 %v339
      %v379 = vunpack.c.l.b16 %v340
      %v380 = vunpack.c.l.b16 %v341
      %v381 = vunpack.c.l.b16 %v342
      %v382 = vunpack.c.l.b16 %v343
      %v383 = vpack.c.b16 %v368, %v367
      %v384 = vpack.c.b16 %v370, %v369
      %v385 = vpack.c.b16 %v372, %v371
      %v386 = vpack.c.b16 %v374, %v373
      %v387 = vpack.c.b16 %v376, %v375
      %v388 = vpack.c.b16 %v378, %v377
      %v389 = vpack.c.b16 %v380, %v379
      %v390 = vpack.c.b16 %v382, %v381
      %399 = vmatprep.subr.bf16.mxu0 0
      %400 = vmatpush1.bf16.msra.mxu0 %v390
      %401 = vmatprep.subr.bf16.mxu0 0
      %402 = vmatpush1.bf16.msra.mxu0 %v389
      %403 = vmatprep.subr.bf16.mxu0 0
      %404 = vmatpush1.bf16.msra.mxu0 %v388
      %405 = vmatprep.subr.bf16.mxu0 0
      %406 = vmatpush1.bf16.msra.mxu0 %v387
      %407 = vmatprep.subr.bf16.mxu0 0
      %408 = vmatpush1.bf16.msra.mxu0 %v386
      %409 = vmatprep.subr.bf16.mxu0 0
      %410 = vmatpush1.bf16.msra.mxu0 %v385
      %411 = vmatprep.subr.bf16.mxu0 0
      %412 = vmatpush1.bf16.msra.mxu0 %v384
      %413 = vmatprep.subr.bf16.mxu0 0
      %414 = vmatpush1.bf16.msra.mxu0 %v383
      %415 = vmatprep.subr.bf16.mxu0 0
      %416 = vmatpush2.bf16.msra.mxu0 0
      %417 = vmatprep.subr.bf16.mxu0 0
      %418 = vmatpush2.bf16.msra.mxu0 0
      %419 = vmatprep.subr.bf16.mxu0 0
      %420 = vmatpush2.bf16.msra.mxu0 0
      %421 = vmatprep.subr.bf16.mxu0 0
      %422 = vmatpush2.bf16.msra.mxu0 0
      %423 = vmatprep.subr.bf16.mxu0 0
      %424 = vmatpush2.bf16.msra.mxu0 0
      %425 = vmatprep.subr.bf16.mxu0 0
      %426 = vmatpush2.bf16.msra.mxu0 0
      %427 = vmatprep.subr.bf16.mxu0 0
      %428 = vmatpush2.bf16.msra.mxu0 0
      %429 = vmatprep.subr.bf16.mxu0 0
      %430 = vmatpush2.bf16.msra.mxu0 0
      %431 = vmatprep.mubr.bf16.mxu0 0
      %432 = vmatmul.mubr.bf16.gmra.mxu0 %v312
      %v433 = vpop.f32.mrf.mxu0
      %v434 = vadd.f32 %v349, %v433
      %v435 = vpop.f32.mrf.mxu0
      %v436 = vpop.f32.mrf.mxu0
      %v437 = vadd.f32 %v349, %v436
      %v438 = vpop.f32.mrf.mxu0
      %439 = vmatprep.mubr.bf16.mxu0 0
      %440 = vmatmul.mubr.bf16.gmra.mxu0 %v313
      %v441 = vpop.f32.mrf.mxu0
      %v442 = vadd.f32 %v349, %v441
      %v443 = vpop.f32.mrf.mxu0
      %v444 = vpop.f32.mrf.mxu0
      %v445 = vadd.f32 %v349, %v444
      %v446 = vpop.f32.mrf.mxu0
      %447 = vmatprep.mubr.bf16.mxu0 0
      %448 = vmatmul.mubr.bf16.gmra.mxu0 %v314
      %v449 = vpop.f32.mrf.mxu0
      %v450 = vadd.f32 %v349, %v449
      %v451 = vpop.f32.mrf.mxu0
      %v452 = vpop.f32.mrf.mxu0
      %v453 = vadd.f32 %v349, %v452
      %v454 = vpop.f32.mrf.mxu0
      %455 = vmatprep.mubr.bf16.mxu0 0
      %456 = vmatmul.mubr.bf16.gmra.mxu0 %v315
      %v457 = vpop.f32.mrf.mxu0
      %v458 = vadd.f32 %v349, %v457
      %v459 = vpop.f32.mrf.mxu0
      %v460 = vpop.f32.mrf.mxu0
      %v461 = vadd.f32 %v349, %v460
      %v462 = vpop.f32.mrf.mxu0
      %463 = vmatprep.mubr.bf16.mxu0 0
      %464 = vmatmul.mubr.bf16.gmra.mxu0 %v316
      %v465 = vpop.f32.mrf.mxu0
      %v466 = vadd.f32 %v349, %v465
      %v467 = vpop.f32.mrf.mxu0
      %v468 = vpop.f32.mrf.mxu0
      %v469 = vadd.f32 %v349, %v468
      %v470 = vpop.f32.mrf.mxu0
      %471 = vmatprep.mubr.bf16.mxu0 0
      %472 = vmatmul.mubr.bf16.gmra.mxu0 %v317
      %v473 = vpop.f32.mrf.mxu0
      %v474 = vadd.f32 %v349, %v473
      %v475 = vpop.f32.mrf.mxu0
      %v476 = vpop.f32.mrf.mxu0
      %v477 = vadd.f32 %v349, %v476
      %v478 = vpop.f32.mrf.mxu0
      %479 = vmatprep.mubr.bf16.mxu0 0
      %480 = vmatmul.mubr.bf16.gmra.mxu0 %v318
      %v481 = vpop.f32.mrf.mxu0
      %v482 = vadd.f32 %v349, %v481
      %v483 = vpop.f32.mrf.mxu0
      %v484 = vpop.f32.mrf.mxu0
      %v485 = vadd.f32 %v349, %v484
      %v486 = vpop.f32.mrf.mxu0
      %487 = vmatprep.mubr.bf16.mxu0 0
      %488 = vmatmul.mubr.bf16.gmra.mxu0 %v319
      %v489 = vpop.f32.mrf.mxu0
      %v490 = vadd.f32 %v349, %v489
      %v491 = vpop.f32.mrf.mxu0
      %v492 = vpop.f32.mrf.mxu0
      %v493 = vadd.f32 %v349, %v492
      %v494 = vpop.f32.mrf.mxu0
      %495 = vmatprep.mubr.bf16.mxu0 0
      %496 = vmatmul.mubr.bf16.gmra.mxu0 %v320
      %v497 = vpop.f32.mrf.mxu0
      %v498 = vadd.f32 %v349, %v497
      %v499 = vpop.f32.mrf.mxu0
      %v500 = vpop.f32.mrf.mxu0
      %v501 = vadd.f32 %v349, %v500
      %v502 = vpop.f32.mrf.mxu0
      %503 = vmatprep.mubr.bf16.mxu0 0
      %504 = vmatmul.mubr.bf16.gmra.mxu0 %v321
      %v505 = vpop.f32.mrf.mxu0
      %v506 = vadd.f32 %v349, %v505
      %v507 = vpop.f32.mrf.mxu0
      %v508 = vpop.f32.mrf.mxu0
      %v509 = vadd.f32 %v349, %v508
      %v510 = vpop.f32.mrf.mxu0
      %511 = vmatprep.mubr.bf16.mxu0 0
      %512 = vmatmul.mubr.bf16.gmra.mxu0 %v322
      %v513 = vpop.f32.mrf.mxu0
      %v514 = vadd.f32 %v349, %v513
      %v515 = vpop.f32.mrf.mxu0
      %v516 = vpop.f32.mrf.mxu0
      %v517 = vadd.f32 %v349, %v516
      %v518 = vpop.f32.mrf.mxu0
      %519 = vmatprep.mubr.bf16.mxu0 0
      %520 = vmatmul.mubr.bf16.gmra.mxu0 %v323
      %v521 = vpop.f32.mrf.mxu0
      %v522 = vadd.f32 %v349, %v521
      %v523 = vpop.f32.mrf.mxu0
      %v524 = vpop.f32.mrf.mxu0
      %v525 = vadd.f32 %v349, %v524
      %v526 = vpop.f32.mrf.mxu0
      %527 = vmatprep.mubr.bf16.mxu0 0
      %528 = vmatmul.mubr.bf16.gmra.mxu0 %v324
      %v529 = vpop.f32.mrf.mxu0
      %v530 = vadd.f32 %v349, %v529
      %v531 = vpop.f32.mrf.mxu0
      %v532 = vpop.f32.mrf.mxu0
      %v533 = vadd.f32 %v349, %v532
      %v534 = vpop.f32.mrf.mxu0
      %535 = vmatprep.mubr.bf16.mxu0 0
      %536 = vmatmul.mubr.bf16.gmra.mxu0 %v325
      %v537 = vpop.f32.mrf.mxu0
      %v538 = vadd.f32 %v349, %v537
      %v539 = vpop.f32.mrf.mxu0
      %v540 = vpop.f32.mrf.mxu0
      %v541 = vadd.f32 %v349, %v540
      %v542 = vpop.f32.mrf.mxu0
      %543 = vmatprep.mubr.bf16.mxu0 0
      %544 = vmatmul.mubr.bf16.gmra.mxu0 %v326
      %v545 = vpop.f32.mrf.mxu0
      %v546 = vadd.f32 %v349, %v545
      %v547 = vpop.f32.mrf.mxu0
      %v548 = vpop.f32.mrf.mxu0
      %v549 = vadd.f32 %v349, %v548
      %v550 = vpop.f32.mrf.mxu0
      %551 = vmatprep.mubr.bf16.mxu0 0
      %552 = vmatmul.mubr.bf16.gmra.mxu0 %v327
      %v553 = vpop.f32.mrf.mxu0
      %v554 = vadd.f32 %v349, %v553
      %v555 = vpop.f32.mrf.mxu0
      %v556 = vpop.f32.mrf.mxu0
      %v557 = vadd.f32 %v349, %v556
      %v558 = vpop.f32.mrf.mxu0
      %559 = vdwg.mxu0
      %v560 = vmax.f32 %v434, 0.0
      %v561 = vmax.f32 %v437, 0.0
      %v562 = vmax.f32 %v442, 0.0
      %v563 = vmax.f32 %v445, 0.0
      %v564 = vmax.f32 %v450, 0.0
      %v565 = vmax.f32 %v453, 0.0
      %v566 = vmax.f32 %v458, 0.0
      %v567 = vmax.f32 %v461, 0.0
      %v568 = vmax.f32 %v466, 0.0
      %v569 = vmax.f32 %v469, 0.0
      %v570 = vmax.f32 %v474, 0.0
      %v571 = vmax.f32 %v477, 0.0
      %v572 = vmax.f32 %v482, 0.0
      %v573 = vmax.f32 %v485, 0.0
      %v574 = vmax.f32 %v490, 0.0
      %v575 = vmax.f32 %v493, 0.0
      %v576 = vmax.f32 %v498, 0.0
      %v577 = vmax.f32 %v501, 0.0
      %v578 = vmax.f32 %v506, 0.0
      %v579 = vmax.f32 %v509, 0.0
      %v580 = vmax.f32 %v514, 0.0
      %v581 = vmax.f32 %v517, 0.0
      %v582 = vmax.f32 %v522, 0.0
      %v583 = vmax.f32 %v525, 0.0
      %v584 = vmax.f32 %v530, 0.0
      %v585 = vmax.f32 %v533, 0.0
      %v586 = vmax.f32 %v538, 0.0
      %v587 = vmax.f32 %v541, 0.0
      %v588 = vmax.f32 %v546, 0.0
      %v589 = vmax.f32 %v549, 0.0
      %v590 = vmax.f32 %v554, 0.0
      %v591 = vmax.f32 %v557, 0.0
      %592 = vst [vmem:[#allocation2] sm:$0xff] 0.0
      %593 = vst [vmem:[#allocation2 + $0x8] sm:$0xff] 0.0
      %594 = vst [vmem:[#allocation2 + $0x10] sm:$0x3] 0.0
      %595 = vst [vmem:[#allocation2 + $0x18] sm:$0xff] 0.0
      %596 = vst [vmem:[#allocation2 + $0x20] sm:$0xff] 0.0
      %597 = vst [vmem:[#allocation2 + $0x28] sm:$0x3] 0.0
      %598 = vst [vmem:[#allocation2 + $0x30] sm:$0xff] 0.0
      %599 = vst [vmem:[#allocation2 + $0x38] sm:$0xff] 0.0
      %600 = vst [vmem:[#allocation2 + $0x40] sm:$0x3] 0.0
      %601 = vst [vmem:[#allocation2 + $0x48] sm:$0xff] 0.0
      %602 = vst [vmem:[#allocation2 + $0x50] sm:$0xff] 0.0
      %603 = vst [vmem:[#allocation2 + $0x58] sm:$0x3] 0.0
      %604 = vst [vmem:[#allocation2 + $0x60] sm:$0xff] 0.0
      %605 = vst [vmem:[#allocation2 + $0x68] sm:$0xff] 0.0
      %606 = vst [vmem:[#allocation2 + $0x70] sm:$0x3] 0.0
      %607 = vst [vmem:[#allocation2 + $0x78] sm:$0xff] 0.0
      %608 = vst [vmem:[#allocation2 + $0x80] sm:$0xff] 0.0
      %609 = vst [vmem:[#allocation2 + $0x88] sm:$0x3] 0.0
      %610 = vst [vmem:[#allocation2 + $0x90] sm:$0xff] 0.0
      %611 = vst [vmem:[#allocation2 + $0x98] sm:$0xff] 0.0
      %612 = vst [vmem:[#allocation2 + $0xa0] sm:$0x3] 0.0
      %613 = vst [vmem:[#allocation2 + $0xa8] sm:$0xff] 0.0
      %614 = vst [vmem:[#allocation2 + $0xb0] sm:$0xff] 0.0
      %615 = vst [vmem:[#allocation2 + $0xb8] sm:$0x3] 0.0
      %616 = vst [vmem:[#allocation2 + $0xc0] sm:$0xff] 0.0
      %617 = vst [vmem:[#allocation2 + $0xc8] sm:$0xff] 0.0
      %618 = vst [vmem:[#allocation2 + $0xd0] sm:$0x3] 0.0
      %619 = vst [vmem:[#allocation2 + $0xd8] sm:$0xff] 0.0
      %620 = vst [vmem:[#allocation2 + $0xe0] sm:$0xff] 0.0
      %621 = vst [vmem:[#allocation2 + $0xe8] sm:$0x3] 0.0
      %622 = vst [vmem:[#allocation2 + $0xf0] sm:$0xff] 0.0
      %623 = vst [vmem:[#allocation2 + $0xf8] sm:$0xff] 0.0
      %624 = vst [vmem:[#allocation2 + $0x100] sm:$0x3] 0.0
      %625 = vst [vmem:[#allocation2 + $0x108] sm:$0xff] 0.0
      %626 = vst [vmem:[#allocation2 + $0x110] sm:$0xff] 0.0
      %627 = vst [vmem:[#allocation2 + $0x118] sm:$0x3] 0.0
      %628 = vst [vmem:[#allocation2 + $0x120] sm:$0xff] 0.0
      %629 = vst [vmem:[#allocation2 + $0x128] sm:$0xff] 0.0
      %630 = vst [vmem:[#allocation2 + $0x130] sm:$0x3] 0.0
      %631 = vst [vmem:[#allocation2 + $0x138] sm:$0xff] 0.0
      %632 = vst [vmem:[#allocation2 + $0x140] sm:$0xff] 0.0
      %633 = vst [vmem:[#allocation2 + $0x148] sm:$0x3] 0.0
      %634 = vst [vmem:[#allocation2 + $0x150] sm:$0xff] 0.0
      %635 = vst [vmem:[#allocation2 + $0x158] sm:$0xff] 0.0
      %636 = vst [vmem:[#allocation2 + $0x160] sm:$0x3] 0.0
      %637 = vst [vmem:[#allocation2 + $0x168] sm:$0xff] 0.0
      %638 = vst [vmem:[#allocation2 + $0x170] sm:$0xff] 0.0
      %639 = vst [vmem:[#allocation2 + $0x178] sm:$0x3] 0.0
      %640 = vst [vmem:[#allocation2 + $0x180] sm:$0xff] 0.0
      %641 = vst [vmem:[#allocation2 + $0x188] sm:$0xff] 0.0
      %642 = vst [vmem:[#allocation2 + $0x190] sm:$0x3] 0.0
      %643 = vst [vmem:[#allocation2 + $0x198] sm:$0xff] 0.0
      %644 = vst [vmem:[#allocation2 + $0x1a0] sm:$0xff] 0.0
      %645 = vst [vmem:[#allocation2 + $0x1a8] sm:$0x3] 0.0
      %s646 = scalar_lea.vmem [#allocation2], 24
      %647 = vst [vmem:[%s646 + $0x1] sm:$0xff] %v560
      %648 = vst [vmem:[%s646 + $0x9] sm:$0xff] %v561
      %649 = vst [vmem:[%s646 + $0x19] sm:$0xff] %v562
      %650 = vst [vmem:[%s646 + $0x21] sm:$0xff] %v563
      %651 = vst [vmem:[%s646 + $0x31] sm:$0xff] %v564
      %652 = vst [vmem:[%s646 + $0x39] sm:$0xff] %v565
      %653 = vst [vmem:[%s646 + $0x49] sm:$0xff] %v566
      %654 = vst [vmem:[%s646 + $0x51] sm:$0xff] %v567
      %655 = vst [vmem:[%s646 + $0x61] sm:$0xff] %v568
      %656 = vst [vmem:[%s646 + $0x69] sm:$0xff] %v569
      %657 = vst [vmem:[%s646 + $0x79] sm:$0xff] %v570
      %658 = vst [vmem:[%s646 + $0x81] sm:$0xff] %v571
      %659 = vst [vmem:[%s646 + $0x91] sm:$0xff] %v572
      %660 = vst [vmem:[%s646 + $0x99] sm:$0xff] %v573
      %661 = vst [vmem:[%s646 + $0xa9] sm:$0xff] %v574
      %662 = vst [vmem:[%s646 + $0xb1] sm:$0xff] %v575
      %663 = vst [vmem:[%s646 + $0xc1] sm:$0xff] %v576
      %664 = vst [vmem:[%s646 + $0xc9] sm:$0xff] %v577
      %665 = vst [vmem:[%s646 + $0xd9] sm:$0xff] %v578
      %666 = vst [vmem:[%s646 + $0xe1] sm:$0xff] %v579
      %667 = vst [vmem:[%s646 + $0xf1] sm:$0xff] %v580
      %668 = vst [vmem:[%s646 + $0xf9] sm:$0xff] %v581
      %669 = vst [vmem:[%s646 + $0x109] sm:$0xff] %v582
      %670 = vst [vmem:[%s646 + $0x111] sm:$0xff] %v583
      %671 = vst [vmem:[%s646 + $0x121] sm:$0xff] %v584
      %672 = vst [vmem:[%s646 + $0x129] sm:$0xff] %v585
      %673 = vst [vmem:[%s646 + $0x139] sm:$0xff] %v586
      %674 = vst [vmem:[%s646 + $0x141] sm:$0xff] %v587
      %675 = vst [vmem:[%s646 + $0x151] sm:$0xff] %v588
      %676 = vst [vmem:[%s646 + $0x159] sm:$0xff] %v589
      %677 = vst [vmem:[%s646 + $0x169] sm:$0xff] %v590
      %678 = vst [vmem:[%s646 + $0x171] sm:$0xff] %v591
      %v679 = vld [vmem:[#allocation2] sm:$0xff]
      %v680 = vld [vmem:[#allocation2 + $0x8] sm:$0xff]
      %v681 = vld [vmem:[#allocation2 + $0x18] sm:$0xff]
      %v682 = vld [vmem:[#allocation2 + $0x20] sm:$0xff]
      %v683 = vld [vmem:[#allocation2 + $0x30] sm:$0xff]
      %v684 = vld [vmem:[#allocation2 + $0x38] sm:$0xff]
      %v685 = vld [vmem:[#allocation2 + $0x48] sm:$0xff]
      %v686 = vld [vmem:[#allocation2 + $0x50] sm:$0xff]
      %v687 = vld [vmem:[#allocation2 + $0x60] sm:$0xff]
      %v688 = vld [vmem:[#allocation2 + $0x68] sm:$0xff]
      %v689 = vld [vmem:[#allocation2 + $0x78] sm:$0xff]
      %v690 = vld [vmem:[#allocation2 + $0x80] sm:$0xff]
      %v691 = vld [vmem:[#allocation2 + $0x90] sm:$0xff]
      %v692 = vld [vmem:[#allocation2 + $0x98] sm:$0xff]
      %v693 = vld [vmem:[#allocation2 + $0xa8] sm:$0xff]
      %v694 = vld [vmem:[#allocation2 + $0xb0] sm:$0xff]
      %v695 = vld [vmem:[#allocation2 + $0xc0] sm:$0xff]
      %v696 = vld [vmem:[#allocation2 + $0xc8] sm:$0xff]
      %v697 = vld [vmem:[#allocation2 + $0xd8] sm:$0xff]
      %v698 = vld [vmem:[#allocation2 + $0xe0] sm:$0xff]
      %v699 = vld [vmem:[#allocation2 + $0xf0] sm:$0xff]
      %v700 = vld [vmem:[#allocation2 + $0xf8] sm:$0xff]
      %v701 = vld [vmem:[#allocation2 + $0x108] sm:$0xff]
      %v702 = vld [vmem:[#allocation2 + $0x110] sm:$0xff]
      %v703 = vld [vmem:[#allocation2 + $0x120] sm:$0xff]
      %v704 = vld [vmem:[#allocation2 + $0x128] sm:$0xff]
      %v705 = vld [vmem:[#allocation2 + $0x138] sm:$0xff]
      %v706 = vld [vmem:[#allocation2 + $0x140] sm:$0xff]
      %v707 = vld [vmem:[#allocation2 + $0x150] sm:$0xff]
      %v708 = vld [vmem:[#allocation2 + $0x158] sm:$0xff]
      %v709 = vld [vmem:[#allocation2 + $0x168] sm:$0xff]
      %v710 = vld [vmem:[#allocation2 + $0x170] sm:$0xff]
      %v711 = vld [vmem:[#allocation2 + $0x1] sm:$0xff]
      %v712 = vld [vmem:[#allocation2 + $0x9] sm:$0xff]
      %v713 = vld [vmem:[#allocation2 + $0x19] sm:$0xff]
      %v714 = vld [vmem:[#allocation2 + $0x21] sm:$0xff]
      %v715 = vld [vmem:[#allocation2 + $0x31] sm:$0xff]
      %v716 = vld [vmem:[#allocation2 + $0x39] sm:$0xff]
      %v717 = vld [vmem:[#allocation2 + $0x49] sm:$0xff]
      %v718 = vld [vmem:[#allocation2 + $0x51] sm:$0xff]
      %v719 = vld [vmem:[#allocation2 + $0x61] sm:$0xff]
      %v720 = vld [vmem:[#allocation2 + $0x69] sm:$0xff]
      %v721 = vld [vmem:[#allocation2 + $0x79] sm:$0xff]
      %v722 = vld [vmem:[#allocation2 + $0x81] sm:$0xff]
      %v723 = vld [vmem:[#allocation2 + $0x91] sm:$0xff]
      %v724 = vld [vmem:[#allocation2 + $0x99] sm:$0xff]
      %v725 = vld [vmem:[#allocation2 + $0xa9] sm:$0xff]
      %v726 = vld [vmem:[#allocation2 + $0xb1] sm:$0xff]
      %v727 = vld [vmem:[#allocation2 + $0xc1] sm:$0xff]
      %v728 = vld [vmem:[#allocation2 + $0xc9] sm:$0xff]
      %v729 = vld [vmem:[#allocation2 + $0xd9] sm:$0xff]
      %v730 = vld [vmem:[#allocation2 + $0xe1] sm:$0xff]
      %v731 = vld [vmem:[#allocation2 + $0xf1] sm:$0xff]
      %v732 = vld [vmem:[#allocation2 + $0xf9] sm:$0xff]
      %v733 = vld [vmem:[#allocation2 + $0x109] sm:$0xff]
      %v734 = vld [vmem:[#allocation2 + $0x111] sm:$0xff]
      %v735 = vld [vmem:[#allocation2 + $0x121] sm:$0xff]
      %v736 = vld [vmem:[#allocation2 + $0x129] sm:$0xff]
      %v737 = vld [vmem:[#allocation2 + $0x139] sm:$0xff]
      %v738 = vld [vmem:[#allocation2 + $0x141] sm:$0xff]
      %v739 = vld [vmem:[#allocation2 + $0x151] sm:$0xff]
      %v740 = vld [vmem:[#allocation2 + $0x159] sm:$0xff]
      %v741 = vld [vmem:[#allocation2 + $0x169] sm:$0xff]
      %v742 = vld [vmem:[#allocation2 + $0x171] sm:$0xff]
      %v743 = vld [vmem:[#allocation2 + $0x2] sm:$0xff]
      %v744 = vld [vmem:[#allocation2 + $0xa] sm:$0xff]
      %v745 = vld [vmem:[#allocation2 + $0x1a] sm:$0xff]
      %v746 = vld [vmem:[#allocation2 + $0x22] sm:$0xff]
      %v747 = vld [vmem:[#allocation2 + $0x32] sm:$0xff]
      %v748 = vld [vmem:[#allocation2 + $0x3a] sm:$0xff]
      %v749 = vld [vmem:[#allocation2 + $0x4a] sm:$0xff]
      %v750 = vld [vmem:[#allocation2 + $0x52] sm:$0xff]
      %v751 = vld [vmem:[#allocation2 + $0x62] sm:$0xff]
      %v752 = vld [vmem:[#allocation2 + $0x6a] sm:$0xff]
      %v753 = vld [vmem:[#allocation2 + $0x7a] sm:$0xff]
      %v754 = vld [vmem:[#allocation2 + $0x82] sm:$0xff]
      %v755 = vld [vmem:[#allocation2 + $0x92] sm:$0xff]
      %v756 = vld [vmem:[#allocation2 + $0x9a] sm:$0xff]
      %v757 = vld [vmem:[#allocation2 + $0xaa] sm:$0xff]
      %v758 = vld [vmem:[#allocation2 + $0xb2] sm:$0xff]
      %v759 = vld [vmem:[#allocation2 + $0xc2] sm:$0xff]
      %v760 = vld [vmem:[#allocation2 + $0xca] sm:$0xff]
      %v761 = vld [vmem:[#allocation2 + $0xda] sm:$0xff]
      %v762 = vld [vmem:[#allocation2 + $0xe2] sm:$0xff]
      %v763 = vld [vmem:[#allocation2 + $0xf2] sm:$0xff]
      %v764 = vld [vmem:[#allocation2 + $0xfa] sm:$0xff]
      %v765 = vld [vmem:[#allocation2 + $0x10a] sm:$0xff]
      %v766 = vld [vmem:[#allocation2 + $0x112] sm:$0xff]
      %v767 = vld [vmem:[#allocation2 + $0x122] sm:$0xff]
      %v768 = vld [vmem:[#allocation2 + $0x12a] sm:$0xff]
      %v769 = vld [vmem:[#allocation2 + $0x13a] sm:$0xff]
      %v770 = vld [vmem:[#allocation2 + $0x142] sm:$0xff]
      %v771 = vld [vmem:[#allocation2 + $0x152] sm:$0xff]
      %v772 = vld [vmem:[#allocation2 + $0x15a] sm:$0xff]
      %v773 = vld [vmem:[#allocation2 + $0x16a] sm:$0xff]
      %v774 = vld [vmem:[#allocation2 + $0x172] sm:$0xff]
      %v775 = vld [vmem:[%s646] sm:$0xff]
      %v776 = vld [vmem:[%s646 + $0x8] sm:$0xff]
      %v777 = vld [vmem:[%s646 + $0x18] sm:$0xff]
      %v778 = vld [vmem:[%s646 + $0x20] sm:$0xff]
      %v779 = vld [vmem:[%s646 + $0x30] sm:$0xff]
      %v780 = vld [vmem:[%s646 + $0x38] sm:$0xff]
      %v781 = vld [vmem:[%s646 + $0x48] sm:$0xff]
      %v782 = vld [vmem:[%s646 + $0x50] sm:$0xff]
      %v783 = vld [vmem:[%s646 + $0x60] sm:$0xff]
      %v784 = vld [vmem:[%s646 + $0x68] sm:$0xff]
      %v785 = vld [vmem:[%s646 + $0x78] sm:$0xff]
      %v786 = vld [vmem:[%s646 + $0x80] sm:$0xff]
      %v787 = vld [vmem:[%s646 + $0x90] sm:$0xff]
      %v788 = vld [vmem:[%s646 + $0x98] sm:$0xff]
      %v789 = vld [vmem:[%s646 + $0xa8] sm:$0xff]
      %v790 = vld [vmem:[%s646 + $0xb0] sm:$0xff]
      %v791 = vld [vmem:[%s646 + $0xc0] sm:$0xff]
      %v792 = vld [vmem:[%s646 + $0xc8] sm:$0xff]
      %v793 = vld [vmem:[%s646 + $0xd8] sm:$0xff]
      %v794 = vld [vmem:[%s646 + $0xe0] sm:$0xff]
      %v795 = vld [vmem:[%s646 + $0xf0] sm:$0xff]
      %v796 = vld [vmem:[%s646 + $0xf8] sm:$0xff]
      %v797 = vld [vmem:[%s646 + $0x108] sm:$0xff]
      %v798 = vld [vmem:[%s646 + $0x110] sm:$0xff]
      %v799 = vld [vmem:[%s646 + $0x120] sm:$0xff]
      %v800 = vld [vmem:[%s646 + $0x128] sm:$0xff]
      %v801 = vld [vmem:[%s646 + $0x138] sm:$0xff]
      %v802 = vld [vmem:[%s646 + $0x140] sm:$0xff]
      %v803 = vld [vmem:[%s646 + $0x150] sm:$0xff]
      %v804 = vld [vmem:[%s646 + $0x158] sm:$0xff]
      %v805 = vld [vmem:[%s646 + $0x168] sm:$0xff]
      %v806 = vld [vmem:[%s646 + $0x170] sm:$0xff]
      %v807 = vld [vmem:[%s646 + $0x1] sm:$0xff]
      %v808 = vld [vmem:[%s646 + $0x9] sm:$0xff]
      %v809 = vld [vmem:[%s646 + $0x19] sm:$0xff]
      %v810 = vld [vmem:[%s646 + $0x21] sm:$0xff]
      %v811 = vld [vmem:[%s646 + $0x31] sm:$0xff]
      %v812 = vld [vmem:[%s646 + $0x39] sm:$0xff]
      %v813 = vld [vmem:[%s646 + $0x49] sm:$0xff]
      %v814 = vld [vmem:[%s646 + $0x51] sm:$0xff]
      %v815 = vld [vmem:[%s646 + $0x61] sm:$0xff]
      %v816 = vld [vmem:[%s646 + $0x69] sm:$0xff]
      %v817 = vld [vmem:[%s646 + $0x79] sm:$0xff]
      %v818 = vld [vmem:[%s646 + $0x81] sm:$0xff]
      %v819 = vld [vmem:[%s646 + $0x91] sm:$0xff]
      %v820 = vld [vmem:[%s646 + $0x99] sm:$0xff]
      %v821 = vld [vmem:[%s646 + $0xa9] sm:$0xff]
      %v822 = vld [vmem:[%s646 + $0xb1] sm:$0xff]
      %v823 = vld [vmem:[%s646 + $0xc1] sm:$0xff]
      %v824 = vld [vmem:[%s646 + $0xc9] sm:$0xff]
      %v825 = vld [vmem:[%s646 + $0xd9] sm:$0xff]
      %v826 = vld [vmem:[%s646 + $0xe1] sm:$0xff]
      %v827 = vld [vmem:[%s646 + $0xf1] sm:$0xff]
      %v828 = vld [vmem:[%s646 + $0xf9] sm:$0xff]
      %v829 = vld [vmem:[%s646 + $0x109] sm:$0xff]
      %v830 = vld [vmem:[%s646 + $0x111] sm:$0xff]
      %v831 = vld [vmem:[%s646 + $0x121] sm:$0xff]
      %v832 = vld [vmem:[%s646 + $0x129] sm:$0xff]
      %v833 = vld [vmem:[%s646 + $0x139] sm:$0xff]
      %v834 = vld [vmem:[%s646 + $0x141] sm:$0xff]
      %v835 = vld [vmem:[%s646 + $0x151] sm:$0xff]
      %v836 = vld [vmem:[%s646 + $0x159] sm:$0xff]
      %v837 = vld [vmem:[%s646 + $0x169] sm:$0xff]
      %v838 = vld [vmem:[%s646 + $0x171] sm:$0xff]
      %v839 = vld [vmem:[%s646 + $0x2] sm:$0xff]
      %v840 = vld [vmem:[%s646 + $0xa] sm:$0xff]
      %v841 = vld [vmem:[%s646 + $0x1a] sm:$0xff]
      %v842 = vld [vmem:[%s646 + $0x22] sm:$0xff]
      %v843 = vld [vmem:[%s646 + $0x32] sm:$0xff]
      %v844 = vld [vmem:[%s646 + $0x3a] sm:$0xff]
      %v845 = vld [vmem:[%s646 + $0x4a] sm:$0xff]
      %v846 = vld [vmem:[%s646 + $0x52] sm:$0xff]
      %v847 = vld [vmem:[%s646 + $0x62] sm:$0xff]
      %v848 = vld [vmem:[%s646 + $0x6a] sm:$0xff]
      %v849 = vld [vmem:[%s646 + $0x7a] sm:$0xff]
      %v850 = vld [vmem:[%s646 + $0x82] sm:$0xff]
      %v851 = vld [vmem:[%s646 + $0x92] sm:$0xff]
      %v852 = vld [vmem:[%s646 + $0x9a] sm:$0xff]
      %v853 = vld [vmem:[%s646 + $0xaa] sm:$0xff]
      %v854 = vld [vmem:[%s646 + $0xb2] sm:$0xff]
      %v855 = vld [vmem:[%s646 + $0xc2] sm:$0xff]
      %v856 = vld [vmem:[%s646 + $0xca] sm:$0xff]
      %v857 = vld [vmem:[%s646 + $0xda] sm:$0xff]
      %v858 = vld [vmem:[%s646 + $0xe2] sm:$0xff]
      %v859 = vld [vmem:[%s646 + $0xf2] sm:$0xff]
      %v860 = vld [vmem:[%s646 + $0xfa] sm:$0xff]
      %v861 = vld [vmem:[%s646 + $0x10a] sm:$0xff]
      %v862 = vld [vmem:[%s646 + $0x112] sm:$0xff]
      %v863 = vld [vmem:[%s646 + $0x122] sm:$0xff]
      %v864 = vld [vmem:[%s646 + $0x12a] sm:$0xff]
      %v865 = vld [vmem:[%s646 + $0x13a] sm:$0xff]
      %v866 = vld [vmem:[%s646 + $0x142] sm:$0xff]
      %v867 = vld [vmem:[%s646 + $0x152] sm:$0xff]
      %v868 = vld [vmem:[%s646 + $0x15a] sm:$0xff]
      %v869 = vld [vmem:[%s646 + $0x16a] sm:$0xff]
      %v870 = vld [vmem:[%s646 + $0x172] sm:$0xff]
      %s871 = scalar_lea.vmem [#allocation2], 48
      %v872 = vld [vmem:[%s871] sm:$0xff]
      %v873 = vld [vmem:[%s871 + $0x8] sm:$0xff]
      %v874 = vld [vmem:[%s871 + $0x18] sm:$0xff]
      %v875 = vld [vmem:[%s871 + $0x20] sm:$0xff]
      %v876 = vld [vmem:[%s871 + $0x30] sm:$0xff]
      %v877 = vld [vmem:[%s871 + $0x38] sm:$0xff]
      %v878 = vld [vmem:[%s871 + $0x48] sm:$0xff]
      %v879 = vld [vmem:[%s871 + $0x50] sm:$0xff]
      %v880 = vld [vmem:[%s871 + $0x60] sm:$0xff]
      %v881 = vld [vmem:[%s871 + $0x68] sm:$0xff]
      %v882 = vld [vmem:[%s871 + $0x78] sm:$0xff]
      %v883 = vld [vmem:[%s871 + $0x80] sm:$0xff]
      %v884 = vld [vmem:[%s871 + $0x90] sm:$0xff]
      %v885 = vld [vmem:[%s871 + $0x98] sm:$0xff]
      %v886 = vld [vmem:[%s871 + $0xa8] sm:$0xff]
      %v887 = vld [vmem:[%s871 + $0xb0] sm:$0xff]
      %v888 = vld [vmem:[%s871 + $0xc0] sm:$0xff]
      %v889 = vld [vmem:[%s871 + $0xc8] sm:$0xff]
      %v890 = vld [vmem:[%s871 + $0xd8] sm:$0xff]
      %v891 = vld [vmem:[%s871 + $0xe0] sm:$0xff]
      %v892 = vld [vmem:[%s871 + $0xf0] sm:$0xff]
      %v893 = vld [vmem:[%s871 + $0xf8] sm:$0xff]
      %v894 = vld [vmem:[%s871 + $0x108] sm:$0xff]
      %v895 = vld [vmem:[%s871 + $0x110] sm:$0xff]
      %v896 = vld [vmem:[%s871 + $0x120] sm:$0xff]
      %v897 = vld [vmem:[%s871 + $0x128] sm:$0xff]
      %v898 = vld [vmem:[%s871 + $0x138] sm:$0xff]
      %v899 = vld [vmem:[%s871 + $0x140] sm:$0xff]
      %v900 = vld [vmem:[%s871 + $0x150] sm:$0xff]
      %v901 = vld [vmem:[%s871 + $0x158] sm:$0xff]
      %v902 = vld [vmem:[%s871 + $0x168] sm:$0xff]
      %v903 = vld [vmem:[%s871 + $0x170] sm:$0xff]
      %v904 = vld [vmem:[%s871 + $0x1] sm:$0xff]
      %v905 = vld [vmem:[%s871 + $0x9] sm:$0xff]
      %v906 = vld [vmem:[%s871 + $0x19] sm:$0xff]
      %v907 = vld [vmem:[%s871 + $0x21] sm:$0xff]
      %v908 = vld [vmem:[%s871 + $0x31] sm:$0xff]
      %v909 = vld [vmem:[%s871 + $0x39] sm:$0xff]
      %v910 = vld [vmem:[%s871 + $0x49] sm:$0xff]
      %v911 = vld [vmem:[%s871 + $0x51] sm:$0xff]
      %v912 = vld [vmem:[%s871 + $0x61] sm:$0xff]
      %v913 = vld [vmem:[%s871 + $0x69] sm:$0xff]
      %v914 = vld [vmem:[%s871 + $0x79] sm:$0xff]
      %v915 = vld [vmem:[%s871 + $0x81] sm:$0xff]
      %v916 = vld [vmem:[%s871 + $0x91] sm:$0xff]
      %v917 = vld [vmem:[%s871 + $0x99] sm:$0xff]
      %v918 = vld [vmem:[%s871 + $0xa9] sm:$0xff]
      %v919 = vld [vmem:[%s871 + $0xb1] sm:$0xff]
      %v920 = vld [vmem:[%s871 + $0xc1] sm:$0xff]
      %v921 = vld [vmem:[%s871 + $0xc9] sm:$0xff]
      %v922 = vld [vmem:[%s871 + $0xd9] sm:$0xff]
      %v923 = vld [vmem:[%s871 + $0xe1] sm:$0xff]
      %v924 = vld [vmem:[%s871 + $0xf1] sm:$0xff]
      %v925 = vld [vmem:[%s871 + $0xf9] sm:$0xff]
      %v926 = vld [vmem:[%s871 + $0x109] sm:$0xff]
      %v927 = vld [vmem:[%s871 + $0x111] sm:$0xff]
      %v928 = vld [vmem:[%s871 + $0x121] sm:$0xff]
      %v929 = vld [vmem:[%s871 + $0x129] sm:$0xff]
      %v930 = vld [vmem:[%s871 + $0x139] sm:$0xff]
      %v931 = vld [vmem:[%s871 + $0x141] sm:$0xff]
      %v932 = vld [vmem:[%s871 + $0x151] sm:$0xff]
      %v933 = vld [vmem:[%s871 + $0x159] sm:$0xff]
      %v934 = vld [vmem:[%s871 + $0x169] sm:$0xff]
      %v935 = vld [vmem:[%s871 + $0x171] sm:$0xff]
      %v936 = vld [vmem:[%s871 + $0x2] sm:$0xff]
      %v937 = vld [vmem:[%s871 + $0xa] sm:$0xff]
      %v938 = vld [vmem:[%s871 + $0x1a] sm:$0xff]
      %v939 = vld [vmem:[%s871 + $0x22] sm:$0xff]
      %v940 = vld [vmem:[%s871 + $0x32] sm:$0xff]
      %v941 = vld [vmem:[%s871 + $0x3a] sm:$0xff]
      %v942 = vld [vmem:[%s871 + $0x4a] sm:$0xff]
      %v943 = vld [vmem:[%s871 + $0x52] sm:$0xff]
      %v944 = vld [vmem:[%s871 + $0x62] sm:$0xff]
      %v945 = vld [vmem:[%s871 + $0x6a] sm:$0xff]
      %v946 = vld [vmem:[%s871 + $0x7a] sm:$0xff]
      %v947 = vld [vmem:[%s871 + $0x82] sm:$0xff]
      %v948 = vld [vmem:[%s871 + $0x92] sm:$0xff]
      %v949 = vld [vmem:[%s871 + $0x9a] sm:$0xff]
      %v950 = vld [vmem:[%s871 + $0xaa] sm:$0xff]
      %v951 = vld [vmem:[%s871 + $0xb2] sm:$0xff]
      %v952 = vld [vmem:[%s871 + $0xc2] sm:$0xff]
      %v953 = vld [vmem:[%s871 + $0xca] sm:$0xff]
      %v954 = vld [vmem:[%s871 + $0xda] sm:$0xff]
      %v955 = vld [vmem:[%s871 + $0xe2] sm:$0xff]
      %v956 = vld [vmem:[%s871 + $0xf2] sm:$0xff]
      %v957 = vld [vmem:[%s871 + $0xfa] sm:$0xff]
      %v958 = vld [vmem:[%s871 + $0x10a] sm:$0xff]
      %v959 = vld [vmem:[%s871 + $0x112] sm:$0xff]
      %v960 = vld [vmem:[%s871 + $0x122] sm:$0xff]
      %v961 = vld [vmem:[%s871 + $0x12a] sm:$0xff]
      %v962 = vld [vmem:[%s871 + $0x13a] sm:$0xff]
      %v963 = vld [vmem:[%s871 + $0x142] sm:$0xff]
      %v964 = vld [vmem:[%s871 + $0x152] sm:$0xff]
      %v965 = vld [vmem:[%s871 + $0x15a] sm:$0xff]
      %v966 = vld [vmem:[%s871 + $0x16a] sm:$0xff]
      %v967 = vld [vmem:[%s871 + $0x172] sm:$0xff]
      %v968 = vpack.c.bf16 %v680, %v679
      %v969 = vpack.c.bf16 %v712, %v711
      %v970 = vpack.c.bf16 %v744, %v743
      %v971 = vpack.c.bf16 %v776, %v775
      %v972 = vpack.c.bf16 %v808, %v807
      %v973 = vpack.c.bf16 %v840, %v839
      %v974 = vpack.c.bf16 %v873, %v872
      %v975 = vpack.c.bf16 %v905, %v904
      %v976 = vpack.c.bf16 %v937, %v936
      %v977 = vpack.c.bf16 %v682, %v681
      %v978 = vpack.c.bf16 %v714, %v713
      %v979 = vpack.c.bf16 %v746, %v745
      %v980 = vpack.c.bf16 %v778, %v777
      %v981 = vpack.c.bf16 %v810, %v809
      %v982 = vpack.c.bf16 %v842, %v841
      %v983 = vpack.c.bf16 %v875, %v874
      %v984 = vpack.c.bf16 %v907, %v906
      %v985 = vpack.c.bf16 %v939, %v938
      %v986 = vpack.c.bf16 %v684, %v683
      %v987 = vpack.c.bf16 %v716, %v715
      %v988 = vpack.c.bf16 %v748, %v747
      %v989 = vpack.c.bf16 %v780, %v779
      %v990 = vpack.c.bf16 %v812, %v811
      %v991 = vpack.c.bf16 %v844, %v843
      %v992 = vpack.c.bf16 %v877, %v876
      %v993 = vpack.c.bf16 %v909, %v908
      %v994 = vpack.c.bf16 %v941, %v940
      %v995 = vpack.c.bf16 %v686, %v685
      %v996 = vpack.c.bf16 %v718, %v717
      %v997 = vpack.c.bf16 %v750, %v749
      %v998 = vpack.c.bf16 %v782, %v781
      %v999 = vpack.c.bf16 %v814, %v813
      %v1000 = vpack.c.bf16 %v846, %v845
      %v1001 = vpack.c.bf16 %v879, %v878
      %v1002 = vpack.c.bf16 %v911, %v910
      %v1003 = vpack.c.bf16 %v943, %v942
      %v1004 = vpack.c.bf16 %v688, %v687
      %v1005 = vpack.c.bf16 %v720, %v719
      %v1006 = vpack.c.bf16 %v752, %v751
      %v1007 = vpack.c.bf16 %v784, %v783
      %v1008 = vpack.c.bf16 %v816, %v815
      %v1009 = vpack.c.bf16 %v848, %v847
      %v1010 = vpack.c.bf16 %v881, %v880
      %v1011 = vpack.c.bf16 %v913, %v912
      %v1012 = vpack.c.bf16 %v945, %v944
      %v1013 = vpack.c.bf16 %v690, %v689
      %v1014 = vpack.c.bf16 %v722, %v721
      %v1015 = vpack.c.bf16 %v754, %v753
      %v1016 = vpack.c.bf16 %v786, %v785
      %v1017 = vpack.c.bf16 %v818, %v817
      %v1018 = vpack.c.bf16 %v850, %v849
      %v1019 = vpack.c.bf16 %v883, %v882
      %v1020 = vpack.c.bf16 %v915, %v914
      %v1021 = vpack.c.bf16 %v947, %v946
      %v1022 = vpack.c.bf16 %v692, %v691
      %v1023 = vpack.c.bf16 %v724, %v723
      %v1024 = vpack.c.bf16 %v756, %v755
      %v1025 = vpack.c.bf16 %v788, %v787
      %v1026 = vpack.c.bf16 %v820, %v819
      %v1027 = vpack.c.bf16 %v852, %v851
      %v1028 = vpack.c.bf16 %v885, %v884
      %v1029 = vpack.c.bf16 %v917, %v916
      %v1030 = vpack.c.bf16 %v949, %v948
      %v1031 = vpack.c.bf16 %v694, %v693
      %v1032 = vpack.c.bf16 %v726, %v725
      %v1033 = vpack.c.bf16 %v758, %v757
      %v1034 = vpack.c.bf16 %v790, %v789
      %v1035 = vpack.c.bf16 %v822, %v821
      %v1036 = vpack.c.bf16 %v854, %v853
      %v1037 = vpack.c.bf16 %v887, %v886
      %v1038 = vpack.c.bf16 %v919, %v918
      %v1039 = vpack.c.bf16 %v951, %v950
      %v1040 = vpack.c.bf16 %v696, %v695
      %v1041 = vpack.c.bf16 %v728, %v727
      %v1042 = vpack.c.bf16 %v760, %v759
      %v1043 = vpack.c.bf16 %v792, %v791
      %v1044 = vpack.c.bf16 %v824, %v823
      %v1045 = vpack.c.bf16 %v856, %v855
      %v1046 = vpack.c.bf16 %v889, %v888
      %v1047 = vpack.c.bf16 %v921, %v920
      %v1048 = vpack.c.bf16 %v953, %v952
      %v1049 = vpack.c.bf16 %v698, %v697
      %v1050 = vpack.c.bf16 %v730, %v729
      %v1051 = vpack.c.bf16 %v762, %v761
      %v1052 = vpack.c.bf16 %v794, %v793
      %v1053 = vpack.c.bf16 %v826, %v825
      %v1054 = vpack.c.bf16 %v858, %v857
      %v1055 = vpack.c.bf16 %v891, %v890
      %v1056 = vpack.c.bf16 %v923, %v922
      %v1057 = vpack.c.bf16 %v955, %v954
      %v1058 = vpack.c.bf16 %v700, %v699
      %v1059 = vpack.c.bf16 %v732, %v731
      %v1060 = vpack.c.bf16 %v764, %v763
      %v1061 = vpack.c.bf16 %v796, %v795
      %v1062 = vpack.c.bf16 %v828, %v827
      %v1063 = vpack.c.bf16 %v860, %v859
      %v1064 = vpack.c.bf16 %v893, %v892
      %v1065 = vpack.c.bf16 %v925, %v924
      %v1066 = vpack.c.bf16 %v957, %v956
      %v1067 = vpack.c.bf16 %v702, %v701
      %v1068 = vpack.c.bf16 %v734, %v733
      %v1069 = vpack.c.bf16 %v766, %v765
      %v1070 = vpack.c.bf16 %v798, %v797
      %v1071 = vpack.c.bf16 %v830, %v829
      %v1072 = vpack.c.bf16 %v862, %v861
      %v1073 = vpack.c.bf16 %v895, %v894
      %v1074 = vpack.c.bf16 %v927, %v926
      %v1075 = vpack.c.bf16 %v959, %v958
      %v1076 = vpack.c.bf16 %v704, %v703
      %v1077 = vpack.c.bf16 %v736, %v735
      %v1078 = vpack.c.bf16 %v768, %v767
      %v1079 = vpack.c.bf16 %v800, %v799
      %v1080 = vpack.c.bf16 %v832, %v831
      %v1081 = vpack.c.bf16 %v864, %v863
      %v1082 = vpack.c.bf16 %v897, %v896
      %v1083 = vpack.c.bf16 %v929, %v928
      %v1084 = vpack.c.bf16 %v961, %v960
      %v1085 = vpack.c.bf16 %v706, %v705
      %v1086 = vpack.c.bf16 %v738, %v737
      %v1087 = vpack.c.bf16 %v770, %v769
      %v1088 = vpack.c.bf16 %v802, %v801
      %v1089 = vpack.c.bf16 %v834, %v833
      %v1090 = vpack.c.bf16 %v866, %v865
      %v1091 = vpack.c.bf16 %v899, %v898
      %v1092 = vpack.c.bf16 %v931, %v930
      %v1093 = vpack.c.bf16 %v963, %v962
      %v1094 = vpack.c.bf16 %v708, %v707
      %v1095 = vpack.c.bf16 %v740, %v739
      %v1096 = vpack.c.bf16 %v772, %v771
      %v1097 = vpack.c.bf16 %v804, %v803
      %v1098 = vpack.c.bf16 %v836, %v835
      %v1099 = vpack.c.bf16 %v868, %v867
      %v1100 = vpack.c.bf16 %v901, %v900
      %v1101 = vpack.c.bf16 %v933, %v932
      %v1102 = vpack.c.bf16 %v965, %v964
      %v1103 = vpack.c.bf16 %v710, %v709
      %v1104 = vpack.c.bf16 %v742, %v741
      %v1105 = vpack.c.bf16 %v774, %v773
      %v1106 = vpack.c.bf16 %v806, %v805
      %v1107 = vpack.c.bf16 %v838, %v837
      %v1108 = vpack.c.bf16 %v870, %v869
      %v1109 = vpack.c.bf16 %v903, %v902
      %v1110 = vpack.c.bf16 %v935, %v934
      %v1111 = vpack.c.bf16 %v967, %v966
      %v1112 = vld [vmem:[%s3] sm:$0xf]
      %v1113 = vld [vmem:[%s3 + $0x4] sm:$0xf]
      %v1114 = vld [vmem:[%s3 + $0x8] sm:$0xf]
      %v1115 = vld [vmem:[%s3 + $0xc] sm:$0xf]
      %v1116 = vld [vmem:[%s3 + $0x10] sm:$0xf]
      %v1117 = vld [vmem:[%s3 + $0x14] sm:$0xf]
      %v1118 = vld [vmem:[%s3 + $0x18] sm:$0xf]
      %v1119 = vld [vmem:[%s3 + $0x1c] sm:$0xf]
      %v1120 = vld [vmem:[%s3 + $0x20] sm:$0xf]
      %v1121 = vld [vmem:[%s3 + $0x24] sm:$0xf]
      %v1122 = vld [vmem:[%s3 + $0x28] sm:$0xf]
      %v1123 = vld [vmem:[%s3 + $0x2c] sm:$0xf]
      %v1124 = vld [vmem:[%s3 + $0x30] sm:$0xf]
      %v1125 = vld [vmem:[%s3 + $0x34] sm:$0xf]
      %v1126 = vld [vmem:[%s3 + $0x38] sm:$0xf]
      %v1127 = vld [vmem:[%s3 + $0x3c] sm:$0xf]
      %v1128 = vld [vmem:[%s3 + $0x40] sm:$0xf]
      %v1129 = vld [vmem:[%s3 + $0x44] sm:$0xf]
      %v1130 = vld [vmem:[%s3 + $0x48] sm:$0xf]
      %v1131 = vld [vmem:[%s3 + $0x4c] sm:$0xf]
      %v1132 = vld [vmem:[%s3 + $0x50] sm:$0xf]
      %v1133 = vld [vmem:[%s3 + $0x54] sm:$0xf]
      %v1134 = vld [vmem:[%s3 + $0x58] sm:$0xf]
      %v1135 = vld [vmem:[%s3 + $0x5c] sm:$0xf]
      %v1136 = vld [vmem:[%s3 + $0x60] sm:$0xf]
      %v1137 = vld [vmem:[%s3 + $0x64] sm:$0xf]
      %v1138 = vld [vmem:[%s3 + $0x68] sm:$0xf]
      %v1139 = vld [vmem:[%s3 + $0x6c] sm:$0xf]
      %v1140 = vld [vmem:[%s3 + $0x70] sm:$0xf]
      %v1141 = vld [vmem:[%s3 + $0x74] sm:$0xf]
      %v1142 = vld [vmem:[%s3 + $0x78] sm:$0xf]
      %v1143 = vld [vmem:[%s3 + $0x7c] sm:$0xf]
      %v1144 = vld [vmem:[%s3 + $0x80] sm:$0xf]
      %v1145 = vld [vmem:[%s3 + $0x84] sm:$0xf]
      %v1146 = vld [vmem:[%s3 + $0x88] sm:$0xf]
      %v1147 = vld [vmem:[%s3 + $0x8c] sm:$0xf]
      %v1148 = vld [vmem:[%s3 + $0x90] sm:$0xf]
      %v1149 = vld [vmem:[%s3 + $0x94] sm:$0xf]
      %v1150 = vld [vmem:[%s3 + $0x98] sm:$0xf]
      %v1151 = vld [vmem:[%s3 + $0x9c] sm:$0xf]
      %v1152 = vld [vmem:[%s3 + $0xa0] sm:$0xf]
      %v1153 = vld [vmem:[%s3 + $0xa4] sm:$0xf]
      %v1154 = vld [vmem:[%s3 + $0xa8] sm:$0xf]
      %v1155 = vld [vmem:[%s3 + $0xac] sm:$0xf]
      %v1156 = vld [vmem:[%s3 + $0xb0] sm:$0xf]
      %v1157 = vld [vmem:[%s3 + $0xb4] sm:$0xf]
      %v1158 = vld [vmem:[%s3 + $0xb8] sm:$0xf]
      %v1159 = vld [vmem:[%s3 + $0xbc] sm:$0xf]
      %v1160 = vld [vmem:[%s3 + $0xc0] sm:$0xf]
      %v1161 = vld [vmem:[%s3 + $0xc4] sm:$0xf]
      %v1162 = vld [vmem:[%s3 + $0xc8] sm:$0xf]
      %v1163 = vld [vmem:[%s3 + $0xcc] sm:$0xf]
      %v1164 = vld [vmem:[%s3 + $0xd0] sm:$0xf]
      %v1165 = vld [vmem:[%s3 + $0xd4] sm:$0xf]
      %v1166 = vld [vmem:[%s3 + $0xd8] sm:$0xf]
      %v1167 = vld [vmem:[%s3 + $0xdc] sm:$0xf]
      %v1168 = vld [vmem:[%s3 + $0xe0] sm:$0xf]
      %v1169 = vld [vmem:[%s3 + $0xe4] sm:$0xf]
      %v1170 = vld [vmem:[%s3 + $0xe8] sm:$0xf]
      %v1171 = vld [vmem:[%s3 + $0xec] sm:$0xf]
      %v1172 = vld [vmem:[%s3 + $0xf0] sm:$0xf]
      %v1173 = vld [vmem:[%s3 + $0xf4] sm:$0xf]
      %v1174 = vld [vmem:[%s3 + $0xf8] sm:$0xf]
      %v1175 = vld [vmem:[%s3 + $0xfc] sm:$0xf]
      %v1176 = vld [vmem:[%s3 + $0x100] sm:$0xf]
      %v1177 = vld [vmem:[%s3 + $0x104] sm:$0xf]
      %v1178 = vld [vmem:[%s3 + $0x108] sm:$0xf]
      %v1179 = vld [vmem:[%s3 + $0x10c] sm:$0xf]
      %v1180 = vld [vmem:[%s3 + $0x110] sm:$0xf]
      %v1181 = vld [vmem:[%s3 + $0x114] sm:$0xf]
      %v1182 = vld [vmem:[%s3 + $0x118] sm:$0xf]
      %v1183 = vld [vmem:[%s3 + $0x11c] sm:$0xf]
      %v1184 = vld [vmem:[%s3 + $0x120] sm:$0xf]
      %v1185 = vld [vmem:[%s3 + $0x124] sm:$0xf]
      %v1186 = vld [vmem:[%s3 + $0x128] sm:$0xf]
      %v1187 = vld [vmem:[%s3 + $0x12c] sm:$0xf]
      %v1188 = vld [vmem:[%s3 + $0x130] sm:$0xf]
      %v1189 = vld [vmem:[%s3 + $0x134] sm:$0xf]
      %v1190 = vld [vmem:[%s3 + $0x138] sm:$0xf]
      %v1191 = vld [vmem:[%s3 + $0x13c] sm:$0xf]
      %v1192 = vld [vmem:[%s3 + $0x140] sm:$0xf]
      %v1193 = vld [vmem:[%s3 + $0x144] sm:$0xf]
      %v1194 = vld [vmem:[%s3 + $0x148] sm:$0xf]
      %v1195 = vld [vmem:[%s3 + $0x14c] sm:$0xf]
      %v1196 = vld [vmem:[%s3 + $0x150] sm:$0xf]
      %v1197 = vld [vmem:[%s3 + $0x154] sm:$0xf]
      %v1198 = vld [vmem:[%s3 + $0x158] sm:$0xf]
      %v1199 = vld [vmem:[%s3 + $0x15c] sm:$0xf]
      %v1200 = vld [vmem:[%s3 + $0x160] sm:$0xf]
      %v1201 = vld [vmem:[%s3 + $0x164] sm:$0xf]
      %v1202 = vld [vmem:[%s3 + $0x168] sm:$0xf]
      %v1203 = vld [vmem:[%s3 + $0x16c] sm:$0xf]
      %v1204 = vld [vmem:[%s3 + $0x170] sm:$0xf]
      %v1205 = vld [vmem:[%s3 + $0x174] sm:$0xf]
      %v1206 = vld [vmem:[%s3 + $0x178] sm:$0xf]
      %v1207 = vld [vmem:[%s3 + $0x17c] sm:$0xf]
      %v1208 = vld [vmem:[%s3 + $0x180] sm:$0xf]
      %v1209 = vld [vmem:[%s3 + $0x184] sm:$0xf]
      %v1210 = vld [vmem:[%s3 + $0x188] sm:$0xf]
      %v1211 = vld [vmem:[%s3 + $0x18c] sm:$0xf]
      %v1212 = vld [vmem:[%s3 + $0x190] sm:$0xf]
      %v1213 = vld [vmem:[%s3 + $0x194] sm:$0xf]
      %v1214 = vld [vmem:[%s3 + $0x198] sm:$0xf]
      %v1215 = vld [vmem:[%s3 + $0x19c] sm:$0xf]
      %v1216 = vld [vmem:[%s3 + $0x1a0] sm:$0xf]
      %v1217 = vld [vmem:[%s3 + $0x1a4] sm:$0xf]
      %v1218 = vld [vmem:[%s3 + $0x1a8] sm:$0xf]
      %v1219 = vld [vmem:[%s3 + $0x1ac] sm:$0xf]
      %v1220 = vld [vmem:[%s3 + $0x1b0] sm:$0xf]
      %v1221 = vld [vmem:[%s3 + $0x1b4] sm:$0xf]
      %v1222 = vld [vmem:[%s3 + $0x1b8] sm:$0xf]
      %v1223 = vld [vmem:[%s3 + $0x1bc] sm:$0xf]
      %v1224 = vld [vmem:[%s3 + $0x1c0] sm:$0xf]
      %v1225 = vld [vmem:[%s3 + $0x1c4] sm:$0xf]
      %v1226 = vld [vmem:[%s3 + $0x1c8] sm:$0xf]
      %v1227 = vld [vmem:[%s3 + $0x1cc] sm:$0xf]
      %v1228 = vld [vmem:[%s3 + $0x1d0] sm:$0xf]
      %v1229 = vld [vmem:[%s3 + $0x1d4] sm:$0xf]
      %v1230 = vld [vmem:[%s3 + $0x1d8] sm:$0xf]
      %v1231 = vld [vmem:[%s3 + $0x1dc] sm:$0xf]
      %v1232 = vld [vmem:[%s3 + $0x1e0] sm:$0xf]
      %v1233 = vld [vmem:[%s3 + $0x1e4] sm:$0xf]
      %v1234 = vld [vmem:[%s3 + $0x1e8] sm:$0xf]
      %v1235 = vld [vmem:[%s3 + $0x1ec] sm:$0xf]
      %v1236 = vld [vmem:[%s3 + $0x1f0] sm:$0xf]
      %v1237 = vld [vmem:[%s3 + $0x1f4] sm:$0xf]
      %v1238 = vld [vmem:[%s3 + $0x1f8] sm:$0xf]
      %v1239 = vld [vmem:[%s3 + $0x1fc] sm:$0xf]
      %v1240 = vld [vmem:[%s3 + $0x200] sm:$0xf]
      %v1241 = vld [vmem:[%s3 + $0x204] sm:$0xf]
      %v1242 = vld [vmem:[%s3 + $0x208] sm:$0xf]
      %v1243 = vld [vmem:[%s3 + $0x20c] sm:$0xf]
      %v1244 = vld [vmem:[%s3 + $0x210] sm:$0xf]
      %v1245 = vld [vmem:[%s3 + $0x214] sm:$0xf]
      %v1246 = vld [vmem:[%s3 + $0x218] sm:$0xf]
      %v1247 = vld [vmem:[%s3 + $0x21c] sm:$0xf]
      %v1248 = vld [vmem:[%s3 + $0x220] sm:$0xf]
      %v1249 = vld [vmem:[%s3 + $0x224] sm:$0xf]
      %v1250 = vld [vmem:[%s3 + $0x228] sm:$0xf]
      %v1251 = vld [vmem:[%s3 + $0x22c] sm:$0xf]
      %v1252 = vld [vmem:[%s3 + $0x230] sm:$0xf]
      %v1253 = vld [vmem:[%s3 + $0x234] sm:$0xf]
      %v1254 = vld [vmem:[%s3 + $0x238] sm:$0xf]
      %v1255 = vld [vmem:[%s3 + $0x23c] sm:$0xf]
      %v1256 = vld [vmem:[%s4] sm:$0x1]
      %v1258 = vlaneseq
      %v1259 = vshrl.u32 %v1258, 7
      %v1260 = vsub.s32 0, %v1259
      %v1261 = vrot.slane %v1256, %v1260
      %v1407 = vunpack.c.l.b16 %v1112
      %v1408 = vunpack.c.l.b16 %v1113
      %v1409 = vunpack.c.l.b16 %v1114
      %v1410 = vunpack.c.l.b16 %v1115
      %v1411 = vunpack.c.l.b16 %v1116
      %v1412 = vunpack.c.l.b16 %v1117
      %v1413 = vunpack.c.l.b16 %v1118
      %v1414 = vunpack.c.l.b16 %v1119
      %v1415 = vunpack.c.l.b16 %v1120
      %v1416 = vunpack.c.l.b16 %v1121
      %v1417 = vunpack.c.l.b16 %v1122
      %v1418 = vunpack.c.l.b16 %v1123
      %v1419 = vunpack.c.l.b16 %v1124
      %v1420 = vunpack.c.l.b16 %v1125
      %v1421 = vunpack.c.l.b16 %v1126
      %v1422 = vunpack.c.l.b16 %v1127
      %v1423 = vunpack.c.l.b16 %v1128
      %v1424 = vunpack.c.l.b16 %v1129
      %v1425 = vunpack.c.l.b16 %v1130
      %v1426 = vunpack.c.l.b16 %v1131
      %v1427 = vunpack.c.l.b16 %v1132
      %v1428 = vunpack.c.l.b16 %v1133
      %v1429 = vunpack.c.l.b16 %v1134
      %v1430 = vunpack.c.l.b16 %v1135
      %v1431 = vunpack.c.l.b16 %v1136
      %v1432 = vunpack.c.l.b16 %v1137
      %v1433 = vunpack.c.l.b16 %v1138
      %v1434 = vunpack.c.l.b16 %v1139
      %v1435 = vunpack.c.l.b16 %v1140
      %v1436 = vunpack.c.l.b16 %v1141
      %v1437 = vunpack.c.l.b16 %v1142
      %v1438 = vunpack.c.l.b16 %v1143
      %v1439 = vunpack.c.l.b16 %v1144
      %v1440 = vunpack.c.l.b16 %v1145
      %v1441 = vunpack.c.l.b16 %v1146
      %v1442 = vunpack.c.l.b16 %v1147
      %v1443 = vunpack.c.l.b16 %v1148
      %v1444 = vunpack.c.l.b16 %v1149
      %v1445 = vunpack.c.l.b16 %v1150
      %v1446 = vunpack.c.l.b16 %v1151
      %v1447 = vunpack.c.l.b16 %v1152
      %v1448 = vunpack.c.l.b16 %v1153
      %v1449 = vunpack.c.l.b16 %v1154
      %v1450 = vunpack.c.l.b16 %v1155
      %v1451 = vunpack.c.l.b16 %v1156
      %v1452 = vunpack.c.l.b16 %v1157
      %v1453 = vunpack.c.l.b16 %v1158
      %v1454 = vunpack.c.l.b16 %v1159
      %v1455 = vunpack.c.l.b16 %v1160
      %v1456 = vunpack.c.l.b16 %v1161
      %v1457 = vunpack.c.l.b16 %v1162
      %v1458 = vunpack.c.l.b16 %v1163
      %v1459 = vunpack.c.l.b16 %v1164
      %v1460 = vunpack.c.l.b16 %v1165
      %v1461 = vunpack.c.l.b16 %v1166
      %v1462 = vunpack.c.l.b16 %v1167
      %v1463 = vunpack.c.l.b16 %v1168
      %v1464 = vunpack.c.l.b16 %v1169
      %v1465 = vunpack.c.l.b16 %v1170
      %v1466 = vunpack.c.l.b16 %v1171
      %v1467 = vunpack.c.l.b16 %v1172
      %v1468 = vunpack.c.l.b16 %v1173
      %v1469 = vunpack.c.l.b16 %v1174
      %v1470 = vunpack.c.l.b16 %v1175
      %v1471 = vunpack.c.l.b16 %v1176
      %v1472 = vunpack.c.l.b16 %v1177
      %v1473 = vunpack.c.l.b16 %v1178
      %v1474 = vunpack.c.l.b16 %v1179
      %v1475 = vunpack.c.l.b16 %v1180
      %v1476 = vunpack.c.l.b16 %v1181
      %v1477 = vunpack.c.l.b16 %v1182
      %v1478 = vunpack.c.l.b16 %v1183
      %v1479 = vunpack.c.l.b16 %v1184
      %v1480 = vunpack.c.l.b16 %v1185
      %v1481 = vunpack.c.l.b16 %v1186
      %v1482 = vunpack.c.l.b16 %v1187
      %v1483 = vunpack.c.l.b16 %v1188
      %v1484 = vunpack.c.l.b16 %v1189
      %v1485 = vunpack.c.l.b16 %v1190
      %v1486 = vunpack.c.l.b16 %v1191
      %v1487 = vunpack.c.l.b16 %v1192
      %v1488 = vunpack.c.l.b16 %v1193
      %v1489 = vunpack.c.l.b16 %v1194
      %v1490 = vunpack.c.l.b16 %v1195
      %v1491 = vunpack.c.l.b16 %v1196
      %v1492 = vunpack.c.l.b16 %v1197
      %v1493 = vunpack.c.l.b16 %v1198
      %v1494 = vunpack.c.l.b16 %v1199
      %v1495 = vunpack.c.l.b16 %v1200
      %v1496 = vunpack.c.l.b16 %v1201
      %v1497 = vunpack.c.l.b16 %v1202
      %v1498 = vunpack.c.l.b16 %v1203
      %v1499 = vunpack.c.l.b16 %v1204
      %v1500 = vunpack.c.l.b16 %v1205
      %v1501 = vunpack.c.l.b16 %v1206
      %v1502 = vunpack.c.l.b16 %v1207
      %v1503 = vunpack.c.l.b16 %v1208
      %v1504 = vunpack.c.l.b16 %v1209
      %v1505 = vunpack.c.l.b16 %v1210
      %v1506 = vunpack.c.l.b16 %v1211
      %v1507 = vunpack.c.l.b16 %v1212
      %v1508 = vunpack.c.l.b16 %v1213
      %v1509 = vunpack.c.l.b16 %v1214
      %v1510 = vunpack.c.l.b16 %v1215
      %v1511 = vunpack.c.l.b16 %v1216
      %v1512 = vunpack.c.l.b16 %v1217
      %v1513 = vunpack.c.l.b16 %v1218
      %v1514 = vunpack.c.l.b16 %v1219
      %v1515 = vunpack.c.l.b16 %v1220
      %v1516 = vunpack.c.l.b16 %v1221
      %v1517 = vunpack.c.l.b16 %v1222
      %v1518 = vunpack.c.l.b16 %v1223
      %v1519 = vunpack.c.l.b16 %v1224
      %v1520 = vunpack.c.l.b16 %v1225
      %v1521 = vunpack.c.l.b16 %v1226
      %v1522 = vunpack.c.l.b16 %v1227
      %v1523 = vunpack.c.l.b16 %v1228
      %v1524 = vunpack.c.l.b16 %v1229
      %v1525 = vunpack.c.l.b16 %v1230
      %v1526 = vunpack.c.l.b16 %v1231
      %v1527 = vunpack.c.l.b16 %v1232
      %v1528 = vunpack.c.l.b16 %v1233
      %v1529 = vunpack.c.l.b16 %v1234
      %v1530 = vunpack.c.l.b16 %v1235
      %v1531 = vunpack.c.l.b16 %v1236
      %v1532 = vunpack.c.l.b16 %v1237
      %v1533 = vunpack.c.l.b16 %v1238
      %v1534 = vunpack.c.l.b16 %v1239
      %v1535 = vunpack.c.l.b16 %v1240
      %v1536 = vunpack.c.l.b16 %v1241
      %v1537 = vunpack.c.l.b16 %v1242
      %v1538 = vunpack.c.l.b16 %v1243
      %v1539 = vunpack.c.l.b16 %v1244
      %v1540 = vunpack.c.l.b16 %v1245
      %v1541 = vunpack.c.l.b16 %v1246
      %v1542 = vunpack.c.l.b16 %v1247
      %v1543 = vunpack.c.l.b16 %v1248
      %v1544 = vunpack.c.l.b16 %v1249
      %v1545 = vunpack.c.l.b16 %v1250
      %v1546 = vunpack.c.l.b16 %v1251
      %v1547 = vunpack.c.l.b16 %v1252
      %v1548 = vunpack.c.l.b16 %v1253
      %v1549 = vunpack.c.l.b16 %v1254
      %v1550 = vunpack.c.l.b16 %v1255
      %v1551 = vpack.c.b16 %v1408, %v1407
      %v1552 = vpack.c.b16 %v1410, %v1409
      %v1553 = vpack.c.b16 %v1412, %v1411
      %v1554 = vpack.c.b16 %v1414, %v1413
      %v1555 = vpack.c.b16 %v1416, %v1415
      %v1556 = vpack.c.b16 %v1418, %v1417
      %v1557 = vpack.c.b16 %v1420, %v1419
      %v1558 = vpack.c.b16 %v1422, %v1421
      %v1559 = vpack.c.b16 %v1424, %v1423
      %v1560 = vpack.c.b16 %v1426, %v1425
      %v1561 = vpack.c.b16 %v1428, %v1427
      %v1562 = vpack.c.b16 %v1430, %v1429
      %v1563 = vpack.c.b16 %v1432, %v1431
      %v1564 = vpack.c.b16 %v1434, %v1433
      %v1565 = vpack.c.b16 %v1436, %v1435
      %v1566 = vpack.c.b16 %v1438, %v1437
      %v1567 = vpack.c.b16 %v1440, %v1439
      %v1568 = vpack.c.b16 %v1442, %v1441
      %v1569 = vpack.c.b16 %v1444, %v1443
      %v1570 = vpack.c.b16 %v1446, %v1445
      %v1571 = vpack.c.b16 %v1448, %v1447
      %v1572 = vpack.c.b16 %v1450, %v1449
      %v1573 = vpack.c.b16 %v1452, %v1451
      %v1574 = vpack.c.b16 %v1454, %v1453
      %v1575 = vpack.c.b16 %v1456, %v1455
      %v1576 = vpack.c.b16 %v1458, %v1457
      %v1577 = vpack.c.b16 %v1460, %v1459
      %v1578 = vpack.c.b16 %v1462, %v1461
      %v1579 = vpack.c.b16 %v1464, %v1463
      %v1580 = vpack.c.b16 %v1466, %v1465
      %v1581 = vpack.c.b16 %v1468, %v1467
      %v1582 = vpack.c.b16 %v1470, %v1469
      %v1583 = vpack.c.b16 %v1472, %v1471
      %v1584 = vpack.c.b16 %v1474, %v1473
      %v1585 = vpack.c.b16 %v1476, %v1475
      %v1586 = vpack.c.b16 %v1478, %v1477
      %v1587 = vpack.c.b16 %v1480, %v1479
      %v1588 = vpack.c.b16 %v1482, %v1481
      %v1589 = vpack.c.b16 %v1484, %v1483
      %v1590 = vpack.c.b16 %v1486, %v1485
      %v1591 = vpack.c.b16 %v1488, %v1487
      %v1592 = vpack.c.b16 %v1490, %v1489
      %v1593 = vpack.c.b16 %v1492, %v1491
      %v1594 = vpack.c.b16 %v1494, %v1493
      %v1595 = vpack.c.b16 %v1496, %v1495
      %v1596 = vpack.c.b16 %v1498, %v1497
      %v1597 = vpack.c.b16 %v1500, %v1499
      %v1598 = vpack.c.b16 %v1502, %v1501
      %v1599 = vpack.c.b16 %v1504, %v1503
      %v1600 = vpack.c.b16 %v1506, %v1505
      %v1601 = vpack.c.b16 %v1508, %v1507
      %v1602 = vpack.c.b16 %v1510, %v1509
      %v1603 = vpack.c.b16 %v1512, %v1511
      %v1604 = vpack.c.b16 %v1514, %v1513
      %v1605 = vpack.c.b16 %v1516, %v1515
      %v1606 = vpack.c.b16 %v1518, %v1517
      %v1607 = vpack.c.b16 %v1520, %v1519
      %v1608 = vpack.c.b16 %v1522, %v1521
      %v1609 = vpack.c.b16 %v1524, %v1523
      %v1610 = vpack.c.b16 %v1526, %v1525
      %v1611 = vpack.c.b16 %v1528, %v1527
      %v1612 = vpack.c.b16 %v1530, %v1529
      %v1613 = vpack.c.b16 %v1532, %v1531
      %v1614 = vpack.c.b16 %v1534, %v1533
      %v1615 = vpack.c.b16 %v1536, %v1535
      %v1616 = vpack.c.b16 %v1538, %v1537
      %v1617 = vpack.c.b16 %v1540, %v1539
      %v1618 = vpack.c.b16 %v1542, %v1541
      %v1619 = vpack.c.b16 %v1544, %v1543
      %v1620 = vpack.c.b16 %v1546, %v1545
      %v1621 = vpack.c.b16 %v1548, %v1547
      %v1622 = vpack.c.b16 %v1550, %v1549
      %1695 = vmatprep.subr.bf16.mxu0 0
      %1696 = vmatpush1.bf16.msra.mxu0 %v1558
      %1697 = vmatprep.subr.bf16.mxu0 0
      %1698 = vmatpush1.bf16.msra.mxu0 %v1557
      %1699 = vmatprep.subr.bf16.mxu0 0
      %1700 = vmatpush1.bf16.msra.mxu0 %v1556
      %1701 = vmatprep.subr.bf16.mxu0 0
      %1702 = vmatpush1.bf16.msra.mxu0 %v1555
      %1703 = vmatprep.subr.bf16.mxu0 0
      %1704 = vmatpush1.bf16.msra.mxu0 %v1554
      %1705 = vmatprep.subr.bf16.mxu0 0
      %1706 = vmatpush1.bf16.msra.mxu0 %v1553
      %1707 = vmatprep.subr.bf16.mxu0 0
      %1708 = vmatpush1.bf16.msra.mxu0 %v1552
      %1709 = vmatprep.subr.bf16.mxu0 0
      %1710 = vmatpush1.bf16.msra.mxu0 %v1551
      %1711 = vmatprep.subr.bf16.mxu0 0
      %1712 = vmatpush2.bf16.msra.mxu0 %v1566
      %1713 = vmatprep.subr.bf16.mxu0 0
      %1714 = vmatpush2.bf16.msra.mxu0 %v1565
      %1715 = vmatprep.subr.bf16.mxu0 0
      %1716 = vmatpush2.bf16.msra.mxu0 %v1564
      %1717 = vmatprep.subr.bf16.mxu0 0
      %1718 = vmatpush2.bf16.msra.mxu0 %v1563
      %1719 = vmatprep.subr.bf16.mxu0 0
      %1720 = vmatpush2.bf16.msra.mxu0 %v1562
      %1721 = vmatprep.subr.bf16.mxu0 0
      %1722 = vmatpush2.bf16.msra.mxu0 %v1561
      %1723 = vmatprep.subr.bf16.mxu0 0
      %1724 = vmatpush2.bf16.msra.mxu0 %v1560
      %1725 = vmatprep.subr.bf16.mxu0 0
      %1726 = vmatpush2.bf16.msra.mxu0 %v1559
      %1727 = vmatprep.mubr.bf16.mxu0 %v969
      %1728 = vmatmul.mubr.bf16.gmra.mxu0 %v968
      %v1729 = vpop.f32.mrf.mxu0
      %v1730 = vadd.f32 %v1261, %v1729
      %v1731 = vpop.f32.mrf.mxu0
      %v1732 = vpop.f32.mrf.mxu0
      %v1733 = vadd.f32 %v1261, %v1732
      %v1734 = vpop.f32.mrf.mxu0
      %1735 = vmatprep.mubr.bf16.mxu0 %v978
      %1736 = vmatmul.mubr.bf16.gmra.mxu0 %v977
      %v1737 = vpop.f32.mrf.mxu0
      %v1738 = vadd.f32 %v1261, %v1737
      %v1739 = vpop.f32.mrf.mxu0
      %v1740 = vpop.f32.mrf.mxu0
      %v1741 = vadd.f32 %v1261, %v1740
      %v1742 = vpop.f32.mrf.mxu0
      %1743 = vmatprep.mubr.bf16.mxu0 %v987
      %1744 = vmatmul.mubr.bf16.gmra.mxu0 %v986
      %v1745 = vpop.f32.mrf.mxu0
      %v1746 = vadd.f32 %v1261, %v1745
      %v1747 = vpop.f32.mrf.mxu0
      %v1748 = vpop.f32.mrf.mxu0
      %v1749 = vadd.f32 %v1261, %v1748
      %v1750 = vpop.f32.mrf.mxu0
      %1751 = vmatprep.mubr.bf16.mxu0 %v996
      %1752 = vmatmul.mubr.bf16.gmra.mxu0 %v995
      %v1753 = vpop.f32.mrf.mxu0
      %v1754 = vadd.f32 %v1261, %v1753
      %v1755 = vpop.f32.mrf.mxu0
      %v1756 = vpop.f32.mrf.mxu0
      %v1757 = vadd.f32 %v1261, %v1756
      %v1758 = vpop.f32.mrf.mxu0
      %1759 = vmatprep.mubr.bf16.mxu0 %v1005
      %1760 = vmatmul.mubr.bf16.gmra.mxu0 %v1004
      %v1761 = vpop.f32.mrf.mxu0
      %v1762 = vadd.f32 %v1261, %v1761
      %v1763 = vpop.f32.mrf.mxu0
      %v1764 = vpop.f32.mrf.mxu0
      %v1765 = vadd.f32 %v1261, %v1764
      %v1766 = vpop.f32.mrf.mxu0
      %1767 = vmatprep.mubr.bf16.mxu0 %v1014
      %1768 = vmatmul.mubr.bf16.gmra.mxu0 %v1013
      %v1769 = vpop.f32.mrf.mxu0
      %v1770 = vadd.f32 %v1261, %v1769
      %v1771 = vpop.f32.mrf.mxu0
      %v1772 = vpop.f32.mrf.mxu0
      %v1773 = vadd.f32 %v1261, %v1772
      %v1774 = vpop.f32.mrf.mxu0
      %1775 = vmatprep.mubr.bf16.mxu0 %v1023
      %1776 = vmatmul.mubr.bf16.gmra.mxu0 %v1022
      %v1777 = vpop.f32.mrf.mxu0
      %v1778 = vadd.f32 %v1261, %v1777
      %v1779 = vpop.f32.mrf.mxu0
      %v1780 = vpop.f32.mrf.mxu0
      %v1781 = vadd.f32 %v1261, %v1780
      %v1782 = vpop.f32.mrf.mxu0
      %1783 = vmatprep.mubr.bf16.mxu0 %v1032
      %1784 = vmatmul.mubr.bf16.gmra.mxu0 %v1031
      %v1785 = vpop.f32.mrf.mxu0
      %v1786 = vadd.f32 %v1261, %v1785
      %v1787 = vpop.f32.mrf.mxu0
      %v1788 = vpop.f32.mrf.mxu0
      %v1789 = vadd.f32 %v1261, %v1788
      %v1790 = vpop.f32.mrf.mxu0
      %1791 = vmatprep.mubr.bf16.mxu0 %v1041
      %1792 = vmatmul.mubr.bf16.gmra.mxu0 %v1040
      %v1793 = vpop.f32.mrf.mxu0
      %v1794 = vadd.f32 %v1261, %v1793
      %v1795 = vpop.f32.mrf.mxu0
      %v1796 = vpop.f32.mrf.mxu0
      %v1797 = vadd.f32 %v1261, %v1796
      %v1798 = vpop.f32.mrf.mxu0
      %1799 = vmatprep.mubr.bf16.mxu0 %v1050
      %1800 = vmatmul.mubr.bf16.gmra.mxu0 %v1049
      %v1801 = vpop.f32.mrf.mxu0
      %v1802 = vadd.f32 %v1261, %v1801
      %v1803 = vpop.f32.mrf.mxu0
      %v1804 = vpop.f32.mrf.mxu0
      %v1805 = vadd.f32 %v1261, %v1804
      %v1806 = vpop.f32.mrf.mxu0
      %1807 = vmatprep.mubr.bf16.mxu0 %v1059
      %1808 = vmatmul.mubr.bf16.gmra.mxu0 %v1058
      %v1809 = vpop.f32.mrf.mxu0
      %v1810 = vadd.f32 %v1261, %v1809
      %v1811 = vpop.f32.mrf.mxu0
      %v1812 = vpop.f32.mrf.mxu0
      %v1813 = vadd.f32 %v1261, %v1812
      %v1814 = vpop.f32.mrf.mxu0
      %1815 = vmatprep.mubr.bf16.mxu0 %v1068
      %1816 = vmatmul.mubr.bf16.gmra.mxu0 %v1067
      %v1817 = vpop.f32.mrf.mxu0
      %v1818 = vadd.f32 %v1261, %v1817
      %v1819 = vpop.f32.mrf.mxu0
      %v1820 = vpop.f32.mrf.mxu0
      %v1821 = vadd.f32 %v1261, %v1820
      %v1822 = vpop.f32.mrf.mxu0
      %1823 = vmatprep.mubr.bf16.mxu0 %v1077
      %1824 = vmatmul.mubr.bf16.gmra.mxu0 %v1076
      %v1825 = vpop.f32.mrf.mxu0
      %v1826 = vadd.f32 %v1261, %v1825
      %v1827 = vpop.f32.mrf.mxu0
      %v1828 = vpop.f32.mrf.mxu0
      %v1829 = vadd.f32 %v1261, %v1828
      %v1830 = vpop.f32.mrf.mxu0
      %1831 = vmatprep.mubr.bf16.mxu0 %v1086
      %1832 = vmatmul.mubr.bf16.gmra.mxu0 %v1085
      %v1833 = vpop.f32.mrf.mxu0
      %v1834 = vadd.f32 %v1261, %v1833
      %v1835 = vpop.f32.mrf.mxu0
      %v1836 = vpop.f32.mrf.mxu0
      %v1837 = vadd.f32 %v1261, %v1836
      %v1838 = vpop.f32.mrf.mxu0
      %1839 = vmatprep.mubr.bf16.mxu0 %v1095
      %1840 = vmatmul.mubr.bf16.gmra.mxu0 %v1094
      %v1841 = vpop.f32.mrf.mxu0
      %v1842 = vadd.f32 %v1261, %v1841
      %v1843 = vpop.f32.mrf.mxu0
      %v1844 = vpop.f32.mrf.mxu0
      %v1845 = vadd.f32 %v1261, %v1844
      %v1846 = vpop.f32.mrf.mxu0
      %1847 = vmatprep.mubr.bf16.mxu0 %v1104
      %1848 = vmatmul.mubr.bf16.gmra.mxu0 %v1103
      %v1849 = vpop.f32.mrf.mxu0
      %v1850 = vadd.f32 %v1261, %v1849
      %v1851 = vpop.f32.mrf.mxu0
      %v1852 = vpop.f32.mrf.mxu0
      %v1853 = vadd.f32 %v1261, %v1852
      %v1854 = vpop.f32.mrf.mxu0
      %1855 = vdwg.mxu0
      %1856 = vmatprep.subr.bf16.mxu0 0
      %1857 = vmatpush1.bf16.msra.mxu0 %v1574
      %1858 = vmatprep.subr.bf16.mxu0 0
      %1859 = vmatpush1.bf16.msra.mxu0 %v1573
      %1860 = vmatprep.subr.bf16.mxu0 0
      %1861 = vmatpush1.bf16.msra.mxu0 %v1572
      %1862 = vmatprep.subr.bf16.mxu0 0
      %1863 = vmatpush1.bf16.msra.mxu0 %v1571
      %1864 = vmatprep.subr.bf16.mxu0 0
      %1865 = vmatpush1.bf16.msra.mxu0 %v1570
      %1866 = vmatprep.subr.bf16.mxu0 0
      %1867 = vmatpush1.bf16.msra.mxu0 %v1569
      %1868 = vmatprep.subr.bf16.mxu0 0
      %1869 = vmatpush1.bf16.msra.mxu0 %v1568
      %1870 = vmatprep.subr.bf16.mxu0 0
      %1871 = vmatpush1.bf16.msra.mxu0 %v1567
      %1872 = vmatprep.subr.bf16.mxu0 0
      %1873 = vmatpush2.bf16.msra.mxu0 %v1582
      %1874 = vmatprep.subr.bf16.mxu0 0
      %1875 = vmatpush2.bf16.msra.mxu0 %v1581
      %1876 = vmatprep.subr.bf16.mxu0 0
      %1877 = vmatpush2.bf16.msra.mxu0 %v1580
      %1878 = vmatprep.subr.bf16.mxu0 0
      %1879 = vmatpush2.bf16.msra.mxu0 %v1579
      %1880 = vmatprep.subr.bf16.mxu0 0
      %1881 = vmatpush2.bf16.msra.mxu0 %v1578
      %1882 = vmatprep.subr.bf16.mxu0 0
      %1883 = vmatpush2.bf16.msra.mxu0 %v1577
      %1884 = vmatprep.subr.bf16.mxu0 0
      %1885 = vmatpush2.bf16.msra.mxu0 %v1576
      %1886 = vmatprep.subr.bf16.mxu0 0
      %1887 = vmatpush2.bf16.msra.mxu0 %v1575
      %1888 = vmatprep.mubr.bf16.mxu0 %v971
      %1889 = vmatmul.mubr.bf16.gmra.mxu0 %v970
      %v1890 = vpop.f32.mrf.mxu0
      %v1891 = vadd.f32 %v1730, %v1890
      %v1892 = vpop.f32.mrf.mxu0
      %v1893 = vpop.f32.mrf.mxu0
      %v1894 = vadd.f32 %v1733, %v1893
      %v1895 = vpop.f32.mrf.mxu0
      %1896 = vmatprep.mubr.bf16.mxu0 %v980
      %1897 = vmatmul.mubr.bf16.gmra.mxu0 %v979
      %v1898 = vpop.f32.mrf.mxu0
      %v1899 = vadd.f32 %v1738, %v1898
      %v1900 = vpop.f32.mrf.mxu0
      %v1901 = vpop.f32.mrf.mxu0
      %v1902 = vadd.f32 %v1741, %v1901
      %v1903 = vpop.f32.mrf.mxu0
      %1904 = vmatprep.mubr.bf16.mxu0 %v989
      %1905 = vmatmul.mubr.bf16.gmra.mxu0 %v988
      %v1906 = vpop.f32.mrf.mxu0
      %v1907 = vadd.f32 %v1746, %v1906
      %v1908 = vpop.f32.mrf.mxu0
      %v1909 = vpop.f32.mrf.mxu0
      %v1910 = vadd.f32 %v1749, %v1909
      %v1911 = vpop.f32.mrf.mxu0
      %1912 = vmatprep.mubr.bf16.mxu0 %v998
      %1913 = vmatmul.mubr.bf16.gmra.mxu0 %v997
      %v1914 = vpop.f32.mrf.mxu0
      %v1915 = vadd.f32 %v1754, %v1914
      %v1916 = vpop.f32.mrf.mxu0
      %v1917 = vpop.f32.mrf.mxu0
      %v1918 = vadd.f32 %v1757, %v1917
      %v1919 = vpop.f32.mrf.mxu0
      %1920 = vmatprep.mubr.bf16.mxu0 %v1007
      %1921 = vmatmul.mubr.bf16.gmra.mxu0 %v1006
      %v1922 = vpop.f32.mrf.mxu0
      %v1923 = vadd.f32 %v1762, %v1922
      %v1924 = vpop.f32.mrf.mxu0
      %v1925 = vpop.f32.mrf.mxu0
      %v1926 = vadd.f32 %v1765, %v1925
      %v1927 = vpop.f32.mrf.mxu0
      %1928 = vmatprep.mubr.bf16.mxu0 %v1016
      %1929 = vmatmul.mubr.bf16.gmra.mxu0 %v1015
      %v1930 = vpop.f32.mrf.mxu0
      %v1931 = vadd.f32 %v1770, %v1930
      %v1932 = vpop.f32.mrf.mxu0
      %v1933 = vpop.f32.mrf.mxu0
      %v1934 = vadd.f32 %v1773, %v1933
      %v1935 = vpop.f32.mrf.mxu0
      %1936 = vmatprep.mubr.bf16.mxu0 %v1025
      %1937 = vmatmul.mubr.bf16.gmra.mxu0 %v1024
      %v1938 = vpop.f32.mrf.mxu0
      %v1939 = vadd.f32 %v1778, %v1938
      %v1940 = vpop.f32.mrf.mxu0
      %v1941 = vpop.f32.mrf.mxu0
      %v1942 = vadd.f32 %v1781, %v1941
      %v1943 = vpop.f32.mrf.mxu0
      %1944 = vmatprep.mubr.bf16.mxu0 %v1034
      %1945 = vmatmul.mubr.bf16.gmra.mxu0 %v1033
      %v1946 = vpop.f32.mrf.mxu0
      %v1947 = vadd.f32 %v1786, %v1946
      %v1948 = vpop.f32.mrf.mxu0
      %v1949 = vpop.f32.mrf.mxu0
      %v1950 = vadd.f32 %v1789, %v1949
      %v1951 = vpop.f32.mrf.mxu0
      %1952 = vmatprep.mubr.bf16.mxu0 %v1043
      %1953 = vmatmul.mubr.bf16.gmra.mxu0 %v1042
      %v1954 = vpop.f32.mrf.mxu0
      %v1955 = vadd.f32 %v1794, %v1954
      %v1956 = vpop.f32.mrf.mxu0
      %v1957 = vpop.f32.mrf.mxu0
      %v1958 = vadd.f32 %v1797, %v1957
      %v1959 = vpop.f32.mrf.mxu0
      %1960 = vmatprep.mubr.bf16.mxu0 %v1052
      %1961 = vmatmul.mubr.bf16.gmra.mxu0 %v1051
      %v1962 = vpop.f32.mrf.mxu0
      %v1963 = vadd.f32 %v1802, %v1962
      %v1964 = vpop.f32.mrf.mxu0
      %v1965 = vpop.f32.mrf.mxu0
      %v1966 = vadd.f32 %v1805, %v1965
      %v1967 = vpop.f32.mrf.mxu0
      %1968 = vmatprep.mubr.bf16.mxu0 %v1061
      %1969 = vmatmul.mubr.bf16.gmra.mxu0 %v1060
      %v1970 = vpop.f32.mrf.mxu0
      %v1971 = vadd.f32 %v1810, %v1970
      %v1972 = vpop.f32.mrf.mxu0
      %v1973 = vpop.f32.mrf.mxu0
      %v1974 = vadd.f32 %v1813, %v1973
      %v1975 = vpop.f32.mrf.mxu0
      %1976 = vmatprep.mubr.bf16.mxu0 %v1070
      %1977 = vmatmul.mubr.bf16.gmra.mxu0 %v1069
      %v1978 = vpop.f32.mrf.mxu0
      %v1979 = vadd.f32 %v1818, %v1978
      %v1980 = vpop.f32.mrf.mxu0
      %v1981 = vpop.f32.mrf.mxu0
      %v1982 = vadd.f32 %v1821, %v1981
      %v1983 = vpop.f32.mrf.mxu0
      %1984 = vmatprep.mubr.bf16.mxu0 %v1079
      %1985 = vmatmul.mubr.bf16.gmra.mxu0 %v1078
      %v1986 = vpop.f32.mrf.mxu0
      %v1987 = vadd.f32 %v1826, %v1986
      %v1988 = vpop.f32.mrf.mxu0
      %v1989 = vpop.f32.mrf.mxu0
      %v1990 = vadd.f32 %v1829, %v1989
      %v1991 = vpop.f32.mrf.mxu0
      %1992 = vmatprep.mubr.bf16.mxu0 %v1088
      %1993 = vmatmul.mubr.bf16.gmra.mxu0 %v1087
      %v1994 = vpop.f32.mrf.mxu0
      %v1995 = vadd.f32 %v1834, %v1994
      %v1996 = vpop.f32.mrf.mxu0
      %v1997 = vpop.f32.mrf.mxu0
      %v1998 = vadd.f32 %v1837, %v1997
      %v1999 = vpop.f32.mrf.mxu0
      %2000 = vmatprep.mubr.bf16.mxu0 %v1097
      %2001 = vmatmul.mubr.bf16.gmra.mxu0 %v1096
      %v2002 = vpop.f32.mrf.mxu0
      %v2003 = vadd.f32 %v1842, %v2002
      %v2004 = vpop.f32.mrf.mxu0
      %v2005 = vpop.f32.mrf.mxu0
      %v2006 = vadd.f32 %v1845, %v2005
      %v2007 = vpop.f32.mrf.mxu0
      %2008 = vmatprep.mubr.bf16.mxu0 %v1106
      %2009 = vmatmul.mubr.bf16.gmra.mxu0 %v1105
      %v2010 = vpop.f32.mrf.mxu0
      %v2011 = vadd.f32 %v1850, %v2010
      %v2012 = vpop.f32.mrf.mxu0
      %v2013 = vpop.f32.mrf.mxu0
      %v2014 = vadd.f32 %v1853, %v2013
      %v2015 = vpop.f32.mrf.mxu0
      %2016 = vdwg.mxu0
      %2017 = vmatprep.subr.bf16.mxu0 0
      %2018 = vmatpush1.bf16.msra.mxu0 %v1590
      %2019 = vmatprep.subr.bf16.mxu0 0
      %2020 = vmatpush1.bf16.msra.mxu0 %v1589
      %2021 = vmatprep.subr.bf16.mxu0 0
      %2022 = vmatpush1.bf16.msra.mxu0 %v1588
      %2023 = vmatprep.subr.bf16.mxu0 0
      %2024 = vmatpush1.bf16.msra.mxu0 %v1587
      %2025 = vmatprep.subr.bf16.mxu0 0
      %2026 = vmatpush1.bf16.msra.mxu0 %v1586
      %2027 = vmatprep.subr.bf16.mxu0 0
      %2028 = vmatpush1.bf16.msra.mxu0 %v1585
      %2029 = vmatprep.subr.bf16.mxu0 0
      %2030 = vmatpush1.bf16.msra.mxu0 %v1584
      %2031 = vmatprep.subr.bf16.mxu0 0
      %2032 = vmatpush1.bf16.msra.mxu0 %v1583
      %2033 = vmatprep.subr.bf16.mxu0 0
      %2034 = vmatpush2.bf16.msra.mxu0 %v1598
      %2035 = vmatprep.subr.bf16.mxu0 0
      %2036 = vmatpush2.bf16.msra.mxu0 %v1597
      %2037 = vmatprep.subr.bf16.mxu0 0
      %2038 = vmatpush2.bf16.msra.mxu0 %v1596
      %2039 = vmatprep.subr.bf16.mxu0 0
      %2040 = vmatpush2.bf16.msra.mxu0 %v1595
      %2041 = vmatprep.subr.bf16.mxu0 0
      %2042 = vmatpush2.bf16.msra.mxu0 %v1594
      %2043 = vmatprep.subr.bf16.mxu0 0
      %2044 = vmatpush2.bf16.msra.mxu0 %v1593
      %2045 = vmatprep.subr.bf16.mxu0 0
      %2046 = vmatpush2.bf16.msra.mxu0 %v1592
      %2047 = vmatprep.subr.bf16.mxu0 0
      %2048 = vmatpush2.bf16.msra.mxu0 %v1591
      %2049 = vmatprep.mubr.bf16.mxu0 %v973
      %2050 = vmatmul.mubr.bf16.gmra.mxu0 %v972
      %v2051 = vpop.f32.mrf.mxu0
      %v2052 = vadd.f32 %v1891, %v2051
      %v2053 = vpop.f32.mrf.mxu0
      %v2054 = vpop.f32.mrf.mxu0
      %v2055 = vadd.f32 %v1894, %v2054
      %v2056 = vpop.f32.mrf.mxu0
      %2057 = vmatprep.mubr.bf16.mxu0 %v982
      %2058 = vmatmul.mubr.bf16.gmra.mxu0 %v981
      %v2059 = vpop.f32.mrf.mxu0
      %v2060 = vadd.f32 %v1899, %v2059
      %v2061 = vpop.f32.mrf.mxu0
      %v2062 = vpop.f32.mrf.mxu0
      %v2063 = vadd.f32 %v1902, %v2062
      %v2064 = vpop.f32.mrf.mxu0
      %2065 = vmatprep.mubr.bf16.mxu0 %v991
      %2066 = vmatmul.mubr.bf16.gmra.mxu0 %v990
      %v2067 = vpop.f32.mrf.mxu0
      %v2068 = vadd.f32 %v1907, %v2067
      %v2069 = vpop.f32.mrf.mxu0
      %v2070 = vpop.f32.mrf.mxu0
      %v2071 = vadd.f32 %v1910, %v2070
      %v2072 = vpop.f32.mrf.mxu0
      %2073 = vmatprep.mubr.bf16.mxu0 %v1000
      %2074 = vmatmul.mubr.bf16.gmra.mxu0 %v999
      %v2075 = vpop.f32.mrf.mxu0
      %v2076 = vadd.f32 %v1915, %v2075
      %v2077 = vpop.f32.mrf.mxu0
      %v2078 = vpop.f32.mrf.mxu0
      %v2079 = vadd.f32 %v1918, %v2078
      %v2080 = vpop.f32.mrf.mxu0
      %2081 = vmatprep.mubr.bf16.mxu0 %v1009
      %2082 = vmatmul.mubr.bf16.gmra.mxu0 %v1008
      %v2083 = vpop.f32.mrf.mxu0
      %v2084 = vadd.f32 %v1923, %v2083
      %v2085 = vpop.f32.mrf.mxu0
      %v2086 = vpop.f32.mrf.mxu0
      %v2087 = vadd.f32 %v1926, %v2086
      %v2088 = vpop.f32.mrf.mxu0
      %2089 = vmatprep.mubr.bf16.mxu0 %v1018
      %2090 = vmatmul.mubr.bf16.gmra.mxu0 %v1017
      %v2091 = vpop.f32.mrf.mxu0
      %v2092 = vadd.f32 %v1931, %v2091
      %v2093 = vpop.f32.mrf.mxu0
      %v2094 = vpop.f32.mrf.mxu0
      %v2095 = vadd.f32 %v1934, %v2094
      %v2096 = vpop.f32.mrf.mxu0
      %2097 = vmatprep.mubr.bf16.mxu0 %v1027
      %2098 = vmatmul.mubr.bf16.gmra.mxu0 %v1026
      %v2099 = vpop.f32.mrf.mxu0
      %v2100 = vadd.f32 %v1939, %v2099
      %v2101 = vpop.f32.mrf.mxu0
      %v2102 = vpop.f32.mrf.mxu0
      %v2103 = vadd.f32 %v1942, %v2102
      %v2104 = vpop.f32.mrf.mxu0
      %2105 = vmatprep.mubr.bf16.mxu0 %v1036
      %2106 = vmatmul.mubr.bf16.gmra.mxu0 %v1035
      %v2107 = vpop.f32.mrf.mxu0
      %v2108 = vadd.f32 %v1947, %v2107
      %v2109 = vpop.f32.mrf.mxu0
      %v2110 = vpop.f32.mrf.mxu0
      %v2111 = vadd.f32 %v1950, %v2110
      %v2112 = vpop.f32.mrf.mxu0
      %2113 = vmatprep.mubr.bf16.mxu0 %v1045
      %2114 = vmatmul.mubr.bf16.gmra.mxu0 %v1044
      %v2115 = vpop.f32.mrf.mxu0
      %v2116 = vadd.f32 %v1955, %v2115
      %v2117 = vpop.f32.mrf.mxu0
      %v2118 = vpop.f32.mrf.mxu0
      %v2119 = vadd.f32 %v1958, %v2118
      %v2120 = vpop.f32.mrf.mxu0
      %2121 = vmatprep.mubr.bf16.mxu0 %v1054
      %2122 = vmatmul.mubr.bf16.gmra.mxu0 %v1053
      %v2123 = vpop.f32.mrf.mxu0
      %v2124 = vadd.f32 %v1963, %v2123
      %v2125 = vpop.f32.mrf.mxu0
      %v2126 = vpop.f32.mrf.mxu0
      %v2127 = vadd.f32 %v1966, %v2126
      %v2128 = vpop.f32.mrf.mxu0
      %2129 = vmatprep.mubr.bf16.mxu0 %v1063
      %2130 = vmatmul.mubr.bf16.gmra.mxu0 %v1062
      %v2131 = vpop.f32.mrf.mxu0
      %v2132 = vadd.f32 %v1971, %v2131
      %v2133 = vpop.f32.mrf.mxu0
      %v2134 = vpop.f32.mrf.mxu0
      %v2135 = vadd.f32 %v1974, %v2134
      %v2136 = vpop.f32.mrf.mxu0
      %2137 = vmatprep.mubr.bf16.mxu0 %v1072
      %2138 = vmatmul.mubr.bf16.gmra.mxu0 %v1071
      %v2139 = vpop.f32.mrf.mxu0
      %v2140 = vadd.f32 %v1979, %v2139
      %v2141 = vpop.f32.mrf.mxu0
      %v2142 = vpop.f32.mrf.mxu0
      %v2143 = vadd.f32 %v1982, %v2142
      %v2144 = vpop.f32.mrf.mxu0
      %2145 = vmatprep.mubr.bf16.mxu0 %v1081
      %2146 = vmatmul.mubr.bf16.gmra.mxu0 %v1080
      %v2147 = vpop.f32.mrf.mxu0
      %v2148 = vadd.f32 %v1987, %v2147
      %v2149 = vpop.f32.mrf.mxu0
      %v2150 = vpop.f32.mrf.mxu0
      %v2151 = vadd.f32 %v1990, %v2150
      %v2152 = vpop.f32.mrf.mxu0
      %2153 = vmatprep.mubr.bf16.mxu0 %v1090
      %2154 = vmatmul.mubr.bf16.gmra.mxu0 %v1089
      %v2155 = vpop.f32.mrf.mxu0
      %v2156 = vadd.f32 %v1995, %v2155
      %v2157 = vpop.f32.mrf.mxu0
      %v2158 = vpop.f32.mrf.mxu0
      %v2159 = vadd.f32 %v1998, %v2158
      %v2160 = vpop.f32.mrf.mxu0
      %2161 = vmatprep.mubr.bf16.mxu0 %v1099
      %2162 = vmatmul.mubr.bf16.gmra.mxu0 %v1098
      %v2163 = vpop.f32.mrf.mxu0
      %v2164 = vadd.f32 %v2003, %v2163
      %v2165 = vpop.f32.mrf.mxu0
      %v2166 = vpop.f32.mrf.mxu0
      %v2167 = vadd.f32 %v2006, %v2166
      %v2168 = vpop.f32.mrf.mxu0
      %2169 = vmatprep.mubr.bf16.mxu0 %v1108
      %2170 = vmatmul.mubr.bf16.gmra.mxu0 %v1107
      %v2171 = vpop.f32.mrf.mxu0
      %v2172 = vadd.f32 %v2011, %v2171
      %v2173 = vpop.f32.mrf.mxu0
      %v2174 = vpop.f32.mrf.mxu0
      %v2175 = vadd.f32 %v2014, %v2174
      %v2176 = vpop.f32.mrf.mxu0
      %2177 = vdwg.mxu0
      %2178 = vmatprep.subr.bf16.mxu0 0
      %2179 = vmatpush1.bf16.msra.mxu0 %v1606
      %2180 = vmatprep.subr.bf16.mxu0 0
      %2181 = vmatpush1.bf16.msra.mxu0 %v1605
      %2182 = vmatprep.subr.bf16.mxu0 0
      %2183 = vmatpush1.bf16.msra.mxu0 %v1604
      %2184 = vmatprep.subr.bf16.mxu0 0
      %2185 = vmatpush1.bf16.msra.mxu0 %v1603
      %2186 = vmatprep.subr.bf16.mxu0 0
      %2187 = vmatpush1.bf16.msra.mxu0 %v1602
      %2188 = vmatprep.subr.bf16.mxu0 0
      %2189 = vmatpush1.bf16.msra.mxu0 %v1601
      %2190 = vmatprep.subr.bf16.mxu0 0
      %2191 = vmatpush1.bf16.msra.mxu0 %v1600
      %2192 = vmatprep.subr.bf16.mxu0 0
      %2193 = vmatpush1.bf16.msra.mxu0 %v1599
      %2194 = vmatprep.subr.bf16.mxu0 0
      %2195 = vmatpush2.bf16.msra.mxu0 %v1614
      %2196 = vmatprep.subr.bf16.mxu0 0
      %2197 = vmatpush2.bf16.msra.mxu0 %v1613
      %2198 = vmatprep.subr.bf16.mxu0 0
      %2199 = vmatpush2.bf16.msra.mxu0 %v1612
      %2200 = vmatprep.subr.bf16.mxu0 0
      %2201 = vmatpush2.bf16.msra.mxu0 %v1611
      %2202 = vmatprep.subr.bf16.mxu0 0
      %2203 = vmatpush2.bf16.msra.mxu0 %v1610
      %2204 = vmatprep.subr.bf16.mxu0 0
      %2205 = vmatpush2.bf16.msra.mxu0 %v1609
      %2206 = vmatprep.subr.bf16.mxu0 0
      %2207 = vmatpush2.bf16.msra.mxu0 %v1608
      %2208 = vmatprep.subr.bf16.mxu0 0
      %2209 = vmatpush2.bf16.msra.mxu0 %v1607
      %2210 = vmatprep.mubr.bf16.mxu0 %v975
      %2211 = vmatmul.mubr.bf16.gmra.mxu0 %v974
      %v2212 = vpop.f32.mrf.mxu0
      %v2213 = vadd.f32 %v2052, %v2212
      %v2214 = vpop.f32.mrf.mxu0
      %v2215 = vpop.f32.mrf.mxu0
      %v2216 = vadd.f32 %v2055, %v2215
      %v2217 = vpop.f32.mrf.mxu0
      %2218 = vmatprep.mubr.bf16.mxu0 %v984
      %2219 = vmatmul.mubr.bf16.gmra.mxu0 %v983
      %v2220 = vpop.f32.mrf.mxu0
      %v2221 = vadd.f32 %v2060, %v2220
      %v2222 = vpop.f32.mrf.mxu0
      %v2223 = vpop.f32.mrf.mxu0
      %v2224 = vadd.f32 %v2063, %v2223
      %v2225 = vpop.f32.mrf.mxu0
      %2226 = vmatprep.mubr.bf16.mxu0 %v993
      %2227 = vmatmul.mubr.bf16.gmra.mxu0 %v992
      %v2228 = vpop.f32.mrf.mxu0
      %v2229 = vadd.f32 %v2068, %v2228
      %v2230 = vpop.f32.mrf.mxu0
      %v2231 = vpop.f32.mrf.mxu0
      %v2232 = vadd.f32 %v2071, %v2231
      %v2233 = vpop.f32.mrf.mxu0
      %2234 = vmatprep.mubr.bf16.mxu0 %v1002
      %2235 = vmatmul.mubr.bf16.gmra.mxu0 %v1001
      %v2236 = vpop.f32.mrf.mxu0
      %v2237 = vadd.f32 %v2076, %v2236
      %v2238 = vpop.f32.mrf.mxu0
      %v2239 = vpop.f32.mrf.mxu0
      %v2240 = vadd.f32 %v2079, %v2239
      %v2241 = vpop.f32.mrf.mxu0
      %2242 = vmatprep.mubr.bf16.mxu0 %v1011
      %2243 = vmatmul.mubr.bf16.gmra.mxu0 %v1010
      %v2244 = vpop.f32.mrf.mxu0
      %v2245 = vadd.f32 %v2084, %v2244
      %v2246 = vpop.f32.mrf.mxu0
      %v2247 = vpop.f32.mrf.mxu0
      %v2248 = vadd.f32 %v2087, %v2247
      %v2249 = vpop.f32.mrf.mxu0
      %2250 = vmatprep.mubr.bf16.mxu0 %v1020
      %2251 = vmatmul.mubr.bf16.gmra.mxu0 %v1019
      %v2252 = vpop.f32.mrf.mxu0
      %v2253 = vadd.f32 %v2092, %v2252
      %v2254 = vpop.f32.mrf.mxu0
      %v2255 = vpop.f32.mrf.mxu0
      %v2256 = vadd.f32 %v2095, %v2255
      %v2257 = vpop.f32.mrf.mxu0
      %2258 = vmatprep.mubr.bf16.mxu0 %v1029
      %2259 = vmatmul.mubr.bf16.gmra.mxu0 %v1028
      %v2260 = vpop.f32.mrf.mxu0
      %v2261 = vadd.f32 %v2100, %v2260
      %v2262 = vpop.f32.mrf.mxu0
      %v2263 = vpop.f32.mrf.mxu0
      %v2264 = vadd.f32 %v2103, %v2263
      %v2265 = vpop.f32.mrf.mxu0
      %2266 = vmatprep.mubr.bf16.mxu0 %v1038
      %2267 = vmatmul.mubr.bf16.gmra.mxu0 %v1037
      %v2268 = vpop.f32.mrf.mxu0
      %v2269 = vadd.f32 %v2108, %v2268
      %v2270 = vpop.f32.mrf.mxu0
      %v2271 = vpop.f32.mrf.mxu0
      %v2272 = vadd.f32 %v2111, %v2271
      %v2273 = vpop.f32.mrf.mxu0
      %2274 = vmatprep.mubr.bf16.mxu0 %v1047
      %2275 = vmatmul.mubr.bf16.gmra.mxu0 %v1046
      %v2276 = vpop.f32.mrf.mxu0
      %v2277 = vadd.f32 %v2116, %v2276
      %v2278 = vpop.f32.mrf.mxu0
      %v2279 = vpop.f32.mrf.mxu0
      %v2280 = vadd.f32 %v2119, %v2279
      %v2281 = vpop.f32.mrf.mxu0
      %2282 = vmatprep.mubr.bf16.mxu0 %v1056
      %2283 = vmatmul.mubr.bf16.gmra.mxu0 %v1055
      %v2284 = vpop.f32.mrf.mxu0
      %v2285 = vadd.f32 %v2124, %v2284
      %v2286 = vpop.f32.mrf.mxu0
      %v2287 = vpop.f32.mrf.mxu0
      %v2288 = vadd.f32 %v2127, %v2287
      %v2289 = vpop.f32.mrf.mxu0
      %2290 = vmatprep.mubr.bf16.mxu0 %v1065
      %2291 = vmatmul.mubr.bf16.gmra.mxu0 %v1064
      %v2292 = vpop.f32.mrf.mxu0
      %v2293 = vadd.f32 %v2132, %v2292
      %v2294 = vpop.f32.mrf.mxu0
      %v2295 = vpop.f32.mrf.mxu0
      %v2296 = vadd.f32 %v2135, %v2295
      %v2297 = vpop.f32.mrf.mxu0
      %2298 = vmatprep.mubr.bf16.mxu0 %v1074
      %2299 = vmatmul.mubr.bf16.gmra.mxu0 %v1073
      %v2300 = vpop.f32.mrf.mxu0
      %v2301 = vadd.f32 %v2140, %v2300
      %v2302 = vpop.f32.mrf.mxu0
      %v2303 = vpop.f32.mrf.mxu0
      %v2304 = vadd.f32 %v2143, %v2303
      %v2305 = vpop.f32.mrf.mxu0
      %2306 = vmatprep.mubr.bf16.mxu0 %v1083
      %2307 = vmatmul.mubr.bf16.gmra.mxu0 %v1082
      %v2308 = vpop.f32.mrf.mxu0
      %v2309 = vadd.f32 %v2148, %v2308
      %v2310 = vpop.f32.mrf.mxu0
      %v2311 = vpop.f32.mrf.mxu0
      %v2312 = vadd.f32 %v2151, %v2311
      %v2313 = vpop.f32.mrf.mxu0
      %2314 = vmatprep.mubr.bf16.mxu0 %v1092
      %2315 = vmatmul.mubr.bf16.gmra.mxu0 %v1091
      %v2316 = vpop.f32.mrf.mxu0
      %v2317 = vadd.f32 %v2156, %v2316
      %v2318 = vpop.f32.mrf.mxu0
      %v2319 = vpop.f32.mrf.mxu0
      %v2320 = vadd.f32 %v2159, %v2319
      %v2321 = vpop.f32.mrf.mxu0
      %2322 = vmatprep.mubr.bf16.mxu0 %v1101
      %2323 = vmatmul.mubr.bf16.gmra.mxu0 %v1100
      %v2324 = vpop.f32.mrf.mxu0
      %v2325 = vadd.f32 %v2164, %v2324
      %v2326 = vpop.f32.mrf.mxu0
      %v2327 = vpop.f32.mrf.mxu0
      %v2328 = vadd.f32 %v2167, %v2327
      %v2329 = vpop.f32.mrf.mxu0
      %2330 = vmatprep.mubr.bf16.mxu0 %v1110
      %2331 = vmatmul.mubr.bf16.gmra.mxu0 %v1109
      %v2332 = vpop.f32.mrf.mxu0
      %v2333 = vadd.f32 %v2172, %v2332
      %v2334 = vpop.f32.mrf.mxu0
      %v2335 = vpop.f32.mrf.mxu0
      %v2336 = vadd.f32 %v2175, %v2335
      %v2337 = vpop.f32.mrf.mxu0
      %2338 = vdwg.mxu0
      %2339 = vmatprep.subr.bf16.mxu0 0
      %2340 = vmatpush1.bf16.msra.mxu0 %v1622
      %2341 = vmatprep.subr.bf16.mxu0 0
      %2342 = vmatpush1.bf16.msra.mxu0 %v1621
      %2343 = vmatprep.subr.bf16.mxu0 0
      %2344 = vmatpush1.bf16.msra.mxu0 %v1620
      %2345 = vmatprep.subr.bf16.mxu0 0
      %2346 = vmatpush1.bf16.msra.mxu0 %v1619
      %2347 = vmatprep.subr.bf16.mxu0 0
      %2348 = vmatpush1.bf16.msra.mxu0 %v1618
      %2349 = vmatprep.subr.bf16.mxu0 0
      %2350 = vmatpush1.bf16.msra.mxu0 %v1617
      %2351 = vmatprep.subr.bf16.mxu0 0
      %2352 = vmatpush1.bf16.msra.mxu0 %v1616
      %2353 = vmatprep.subr.bf16.mxu0 0
      %2354 = vmatpush1.bf16.msra.mxu0 %v1615
      %2355 = vmatprep.subr.bf16.mxu0 0
      %2356 = vmatpush2.bf16.msra.mxu0 0
      %2357 = vmatprep.subr.bf16.mxu0 0
      %2358 = vmatpush2.bf16.msra.mxu0 0
      %2359 = vmatprep.subr.bf16.mxu0 0
      %2360 = vmatpush2.bf16.msra.mxu0 0
      %2361 = vmatprep.subr.bf16.mxu0 0
      %2362 = vmatpush2.bf16.msra.mxu0 0
      %2363 = vmatprep.subr.bf16.mxu0 0
      %2364 = vmatpush2.bf16.msra.mxu0 0
      %2365 = vmatprep.subr.bf16.mxu0 0
      %2366 = vmatpush2.bf16.msra.mxu0 0
      %2367 = vmatprep.subr.bf16.mxu0 0
      %2368 = vmatpush2.bf16.msra.mxu0 0
      %2369 = vmatprep.subr.bf16.mxu0 0
      %2370 = vmatpush2.bf16.msra.mxu0 0
      %2371 = vmatprep.mubr.bf16.mxu0 0
      %2372 = vmatmul.mubr.bf16.gmra.mxu0 %v976
      %v2373 = vpop.f32.mrf.mxu0
      %v2374 = vadd.f32 %v2213, %v2373
      %v2375 = vpop.f32.mrf.mxu0
      %v2376 = vpop.f32.mrf.mxu0
      %v2377 = vadd.f32 %v2216, %v2376
      %v2378 = vpop.f32.mrf.mxu0
      %2379 = vmatprep.mubr.bf16.mxu0 0
      %2380 = vmatmul.mubr.bf16.gmra.mxu0 %v985
      %v2381 = vpop.f32.mrf.mxu0
      %v2382 = vadd.f32 %v2221, %v2381
      %v2383 = vpop.f32.mrf.mxu0
      %v2384 = vpop.f32.mrf.mxu0
      %v2385 = vadd.f32 %v2224, %v2384
      %v2386 = vpop.f32.mrf.mxu0
      %2387 = vmatprep.mubr.bf16.mxu0 0
      %2388 = vmatmul.mubr.bf16.gmra.mxu0 %v994
      %v2389 = vpop.f32.mrf.mxu0
      %v2390 = vadd.f32 %v2229, %v2389
      %v2391 = vpop.f32.mrf.mxu0
      %v2392 = vpop.f32.mrf.mxu0
      %v2393 = vadd.f32 %v2232, %v2392
      %v2394 = vpop.f32.mrf.mxu0
      %2395 = vmatprep.mubr.bf16.mxu0 0
      %2396 = vmatmul.mubr.bf16.gmra.mxu0 %v1003
      %v2397 = vpop.f32.mrf.mxu0
      %v2398 = vadd.f32 %v2237, %v2397
      %v2399 = vpop.f32.mrf.mxu0
      %v2400 = vpop.f32.mrf.mxu0
      %v2401 = vadd.f32 %v2240, %v2400
      %v2402 = vpop.f32.mrf.mxu0
      %2403 = vmatprep.mubr.bf16.mxu0 0
      %2404 = vmatmul.mubr.bf16.gmra.mxu0 %v1012
      %v2405 = vpop.f32.mrf.mxu0
      %v2406 = vadd.f32 %v2245, %v2405
      %v2407 = vpop.f32.mrf.mxu0
      %v2408 = vpop.f32.mrf.mxu0
      %v2409 = vadd.f32 %v2248, %v2408
      %v2410 = vpop.f32.mrf.mxu0
      %2411 = vmatprep.mubr.bf16.mxu0 0
      %2412 = vmatmul.mubr.bf16.gmra.mxu0 %v1021
      %v2413 = vpop.f32.mrf.mxu0
      %v2414 = vadd.f32 %v2253, %v2413
      %v2415 = vpop.f32.mrf.mxu0
      %v2416 = vpop.f32.mrf.mxu0
      %v2417 = vadd.f32 %v2256, %v2416
      %v2418 = vpop.f32.mrf.mxu0
      %2419 = vmatprep.mubr.bf16.mxu0 0
      %2420 = vmatmul.mubr.bf16.gmra.mxu0 %v1030
      %v2421 = vpop.f32.mrf.mxu0
      %v2422 = vadd.f32 %v2261, %v2421
      %v2423 = vpop.f32.mrf.mxu0
      %v2424 = vpop.f32.mrf.mxu0
      %v2425 = vadd.f32 %v2264, %v2424
      %v2426 = vpop.f32.mrf.mxu0
      %2427 = vmatprep.mubr.bf16.mxu0 0
      %2428 = vmatmul.mubr.bf16.gmra.mxu0 %v1039
      %v2429 = vpop.f32.mrf.mxu0
      %v2430 = vadd.f32 %v2269, %v2429
      %v2431 = vpop.f32.mrf.mxu0
      %v2432 = vpop.f32.mrf.mxu0
      %v2433 = vadd.f32 %v2272, %v2432
      %v2434 = vpop.f32.mrf.mxu0
      %2435 = vmatprep.mubr.bf16.mxu0 0
      %2436 = vmatmul.mubr.bf16.gmra.mxu0 %v1048
      %v2437 = vpop.f32.mrf.mxu0
      %v2438 = vadd.f32 %v2277, %v2437
      %v2439 = vpop.f32.mrf.mxu0
      %v2440 = vpop.f32.mrf.mxu0
      %v2441 = vadd.f32 %v2280, %v2440
      %v2442 = vpop.f32.mrf.mxu0
      %2443 = vmatprep.mubr.bf16.mxu0 0
      %2444 = vmatmul.mubr.bf16.gmra.mxu0 %v1057
      %v2445 = vpop.f32.mrf.mxu0
      %v2446 = vadd.f32 %v2285, %v2445
      %v2447 = vpop.f32.mrf.mxu0
      %v2448 = vpop.f32.mrf.mxu0
      %v2449 = vadd.f32 %v2288, %v2448
      %v2450 = vpop.f32.mrf.mxu0
      %2451 = vmatprep.mubr.bf16.mxu0 0
      %2452 = vmatmul.mubr.bf16.gmra.mxu0 %v1066
      %v2453 = vpop.f32.mrf.mxu0
      %v2454 = vadd.f32 %v2293, %v2453
      %v2455 = vpop.f32.mrf.mxu0
      %v2456 = vpop.f32.mrf.mxu0
      %v2457 = vadd.f32 %v2296, %v2456
      %v2458 = vpop.f32.mrf.mxu0
      %2459 = vmatprep.mubr.bf16.mxu0 0
      %2460 = vmatmul.mubr.bf16.gmra.mxu0 %v1075
      %v2461 = vpop.f32.mrf.mxu0
      %v2462 = vadd.f32 %v2301, %v2461
      %v2463 = vpop.f32.mrf.mxu0
      %v2464 = vpop.f32.mrf.mxu0
      %v2465 = vadd.f32 %v2304, %v2464
      %v2466 = vpop.f32.mrf.mxu0
      %2467 = vmatprep.mubr.bf16.mxu0 0
      %2468 = vmatmul.mubr.bf16.gmra.mxu0 %v1084
      %v2469 = vpop.f32.mrf.mxu0
      %v2470 = vadd.f32 %v2309, %v2469
      %v2471 = vpop.f32.mrf.mxu0
      %v2472 = vpop.f32.mrf.mxu0
      %v2473 = vadd.f32 %v2312, %v2472
      %v2474 = vpop.f32.mrf.mxu0
      %2475 = vmatprep.mubr.bf16.mxu0 0
      %2476 = vmatmul.mubr.bf16.gmra.mxu0 %v1093
      %v2477 = vpop.f32.mrf.mxu0
      %v2478 = vadd.f32 %v2317, %v2477
      %v2479 = vpop.f32.mrf.mxu0
      %v2480 = vpop.f32.mrf.mxu0
      %v2481 = vadd.f32 %v2320, %v2480
      %v2482 = vpop.f32.mrf.mxu0
      %2483 = vmatprep.mubr.bf16.mxu0 0
      %2484 = vmatmul.mubr.bf16.gmra.mxu0 %v1102
      %v2485 = vpop.f32.mrf.mxu0
      %v2486 = vadd.f32 %v2325, %v2485
      %v2487 = vpop.f32.mrf.mxu0
      %v2488 = vpop.f32.mrf.mxu0
      %v2489 = vadd.f32 %v2328, %v2488
      %v2490 = vpop.f32.mrf.mxu0
      %2491 = vmatprep.mubr.bf16.mxu0 0
      %2492 = vmatmul.mubr.bf16.gmra.mxu0 %v1111
      %v2493 = vpop.f32.mrf.mxu0
      %v2494 = vadd.f32 %v2333, %v2493
      %v2495 = vpop.f32.mrf.mxu0
      %v2496 = vpop.f32.mrf.mxu0
      %v2497 = vadd.f32 %v2336, %v2496
      %v2498 = vpop.f32.mrf.mxu0
      %2499 = vdwg.mxu0
      %v2500 = vmax.f32 %v2374, 0.0
      %v2501 = vmax.f32 %v2377, 0.0
      %v2502 = vmax.f32 %v2382, 0.0
      %v2503 = vmax.f32 %v2385, 0.0
      %v2504 = vmax.f32 %v2390, 0.0
      %v2505 = vmax.f32 %v2393, 0.0
      %v2506 = vmax.f32 %v2398, 0.0
      %v2507 = vmax.f32 %v2401, 0.0
      %v2508 = vmax.f32 %v2406, 0.0
      %v2509 = vmax.f32 %v2409, 0.0
      %v2510 = vmax.f32 %v2414, 0.0
      %v2511 = vmax.f32 %v2417, 0.0
      %v2512 = vmax.f32 %v2422, 0.0
      %v2513 = vmax.f32 %v2425, 0.0
      %v2514 = vmax.f32 %v2430, 0.0
      %v2515 = vmax.f32 %v2433, 0.0
      %v2516 = vmax.f32 %v2438, 0.0
      %v2517 = vmax.f32 %v2441, 0.0
      %v2518 = vmax.f32 %v2446, 0.0
      %v2519 = vmax.f32 %v2449, 0.0
      %v2520 = vmax.f32 %v2454, 0.0
      %v2521 = vmax.f32 %v2457, 0.0
      %v2522 = vmax.f32 %v2462, 0.0
      %v2523 = vmax.f32 %v2465, 0.0
      %v2524 = vmax.f32 %v2470, 0.0
      %v2525 = vmax.f32 %v2473, 0.0
      %v2526 = vmax.f32 %v2478, 0.0
      %v2527 = vmax.f32 %v2481, 0.0
      %v2528 = vmax.f32 %v2486, 0.0
      %v2529 = vmax.f32 %v2489, 0.0
      %v2530 = vmax.f32 %v2494, 0.0
      %v2531 = vmax.f32 %v2497, 0.0
      %v2532 = vpack.c.bf16 %v2501, %v2500
      %v2533 = vpack.c.bf16 %v2503, %v2502
      %v2534 = vpack.c.bf16 %v2505, %v2504
      %v2535 = vpack.c.bf16 %v2507, %v2506
      %v2536 = vpack.c.bf16 %v2509, %v2508
      %v2537 = vpack.c.bf16 %v2511, %v2510
      %v2538 = vpack.c.bf16 %v2513, %v2512
      %v2539 = vpack.c.bf16 %v2515, %v2514
      %v2540 = vpack.c.bf16 %v2517, %v2516
      %v2541 = vpack.c.bf16 %v2519, %v2518
      %v2542 = vpack.c.bf16 %v2521, %v2520
      %v2543 = vpack.c.bf16 %v2523, %v2522
      %v2544 = vpack.c.bf16 %v2525, %v2524
      %v2545 = vpack.c.bf16 %v2527, %v2526
      %v2546 = vpack.c.bf16 %v2529, %v2528
      %v2547 = vpack.c.bf16 %v2531, %v2530
      %v2548 = vld [vmem:[%s5] sm:$0xf]
      %v2549 = vld [vmem:[%s5 + $0x4] sm:$0xf]
      %v2550 = vld [vmem:[%s5 + $0x8] sm:$0xf]
      %v2551 = vld [vmem:[%s5 + $0xc] sm:$0xf]
      %v2552 = vld [vmem:[%s5 + $0x10] sm:$0xf]
      %v2553 = vld [vmem:[%s5 + $0x14] sm:$0xf]
      %v2554 = vld [vmem:[%s5 + $0x18] sm:$0xf]
      %v2555 = vld [vmem:[%s5 + $0x1c] sm:$0xf]
      %v2556 = vld [vmem:[%s5 + $0x20] sm:$0xf]
      %v2557 = vld [vmem:[%s5 + $0x24] sm:$0xf]
      %v2558 = vld [vmem:[%s5 + $0x28] sm:$0xf]
      %v2559 = vld [vmem:[%s5 + $0x2c] sm:$0xf]
      %v2560 = vld [vmem:[%s5 + $0x30] sm:$0xf]
      %v2561 = vld [vmem:[%s5 + $0x34] sm:$0xf]
      %v2562 = vld [vmem:[%s5 + $0x38] sm:$0xf]
      %v2563 = vld [vmem:[%s5 + $0x3c] sm:$0xf]
      %v2564 = vld [vmem:[%s6] sm:$0x1]
      %v2566 = vlaneseq
      %v2567 = vshrl.u32 %v2566, 7
      %v2568 = vsub.s32 0, %v2567
      %v2569 = vrot.slane %v2564, %v2568
      %v2587 = vunpack.c.l.b16 %v2548
      %v2588 = vunpack.c.l.b16 %v2549
      %v2589 = vunpack.c.l.b16 %v2550
      %v2590 = vunpack.c.l.b16 %v2551
      %v2591 = vunpack.c.l.b16 %v2552
      %v2592 = vunpack.c.l.b16 %v2553
      %v2593 = vunpack.c.l.b16 %v2554
      %v2594 = vunpack.c.l.b16 %v2555
      %v2595 = vunpack.c.l.b16 %v2556
      %v2596 = vunpack.c.l.b16 %v2557
      %v2597 = vunpack.c.l.b16 %v2558
      %v2598 = vunpack.c.l.b16 %v2559
      %v2599 = vunpack.c.l.b16 %v2560
      %v2600 = vunpack.c.l.b16 %v2561
      %v2601 = vunpack.c.l.b16 %v2562
      %v2602 = vunpack.c.l.b16 %v2563
      %v2603 = vpack.c.b16 %v2588, %v2587
      %v2604 = vpack.c.b16 %v2590, %v2589
      %v2605 = vpack.c.b16 %v2592, %v2591
      %v2606 = vpack.c.b16 %v2594, %v2593
      %v2607 = vpack.c.b16 %v2596, %v2595
      %v2608 = vpack.c.b16 %v2598, %v2597
      %v2609 = vpack.c.b16 %v2600, %v2599
      %v2610 = vpack.c.b16 %v2602, %v2601
      %2619 = vmatprep.subr.bf16.mxu0 0
      %2620 = vmatpush1.bf16.msra.mxu0 %v2610
      %2621 = vmatprep.subr.bf16.mxu0 0
      %2622 = vmatpush1.bf16.msra.mxu0 %v2609
      %2623 = vmatprep.subr.bf16.mxu0 0
      %2624 = vmatpush1.bf16.msra.mxu0 %v2608
      %2625 = vmatprep.subr.bf16.mxu0 0
      %2626 = vmatpush1.bf16.msra.mxu0 %v2607
      %2627 = vmatprep.subr.bf16.mxu0 0
      %2628 = vmatpush1.bf16.msra.mxu0 %v2606
      %2629 = vmatprep.subr.bf16.mxu0 0
      %2630 = vmatpush1.bf16.msra.mxu0 %v2605
      %2631 = vmatprep.subr.bf16.mxu0 0
      %2632 = vmatpush1.bf16.msra.mxu0 %v2604
      %2633 = vmatprep.subr.bf16.mxu0 0
      %2634 = vmatpush1.bf16.msra.mxu0 %v2603
      %2635 = vmatprep.subr.bf16.mxu0 0
      %2636 = vmatpush2.bf16.msra.mxu0 0
      %2637 = vmatprep.subr.bf16.mxu0 0
      %2638 = vmatpush2.bf16.msra.mxu0 0
      %2639 = vmatprep.subr.bf16.mxu0 0
      %2640 = vmatpush2.bf16.msra.mxu0 0
      %2641 = vmatprep.subr.bf16.mxu0 0
      %2642 = vmatpush2.bf16.msra.mxu0 0
      %2643 = vmatprep.subr.bf16.mxu0 0
      %2644 = vmatpush2.bf16.msra.mxu0 0
      %2645 = vmatprep.subr.bf16.mxu0 0
      %2646 = vmatpush2.bf16.msra.mxu0 0
      %2647 = vmatprep.subr.bf16.mxu0 0
      %2648 = vmatpush2.bf16.msra.mxu0 0
      %2649 = vmatprep.subr.bf16.mxu0 0
      %2650 = vmatpush2.bf16.msra.mxu0 0
      %2651 = vmatprep.mubr.bf16.mxu0 0
      %2652 = vmatmul.mubr.bf16.gmra.mxu0 %v2532
      %v2653 = vpop.f32.mrf.mxu0
      %v2654 = vadd.f32 %v2569, %v2653
      %v2655 = vpop.f32.mrf.mxu0
      %v2656 = vpop.f32.mrf.mxu0
      %v2657 = vadd.f32 %v2569, %v2656
      %v2658 = vpop.f32.mrf.mxu0
      %2659 = vmatprep.mubr.bf16.mxu0 0
      %2660 = vmatmul.mubr.bf16.gmra.mxu0 %v2533
      %v2661 = vpop.f32.mrf.mxu0
      %v2662 = vadd.f32 %v2569, %v2661
      %v2663 = vpop.f32.mrf.mxu0
      %v2664 = vpop.f32.mrf.mxu0
      %v2665 = vadd.f32 %v2569, %v2664
      %v2666 = vpop.f32.mrf.mxu0
      %2667 = vmatprep.mubr.bf16.mxu0 0
      %2668 = vmatmul.mubr.bf16.gmra.mxu0 %v2534
      %v2669 = vpop.f32.mrf.mxu0
      %v2670 = vadd.f32 %v2569, %v2669
      %v2671 = vpop.f32.mrf.mxu0
      %v2672 = vpop.f32.mrf.mxu0
      %v2673 = vadd.f32 %v2569, %v2672
      %v2674 = vpop.f32.mrf.mxu0
      %2675 = vmatprep.mubr.bf16.mxu0 0
      %2676 = vmatmul.mubr.bf16.gmra.mxu0 %v2535
      %v2677 = vpop.f32.mrf.mxu0
      %v2678 = vadd.f32 %v2569, %v2677
      %v2679 = vpop.f32.mrf.mxu0
      %v2680 = vpop.f32.mrf.mxu0
      %v2681 = vadd.f32 %v2569, %v2680
      %v2682 = vpop.f32.mrf.mxu0
      %2683 = vmatprep.mubr.bf16.mxu0 0
      %2684 = vmatmul.mubr.bf16.gmra.mxu0 %v2536
      %v2685 = vpop.f32.mrf.mxu0
      %v2686 = vadd.f32 %v2569, %v2685
      %v2687 = vpop.f32.mrf.mxu0
      %v2688 = vpop.f32.mrf.mxu0
      %v2689 = vadd.f32 %v2569, %v2688
      %v2690 = vpop.f32.mrf.mxu0
      %2691 = vmatprep.mubr.bf16.mxu0 0
      %2692 = vmatmul.mubr.bf16.gmra.mxu0 %v2537
      %v2693 = vpop.f32.mrf.mxu0
      %v2694 = vadd.f32 %v2569, %v2693
      %v2695 = vpop.f32.mrf.mxu0
      %v2696 = vpop.f32.mrf.mxu0
      %v2697 = vadd.f32 %v2569, %v2696
      %v2698 = vpop.f32.mrf.mxu0
      %2699 = vmatprep.mubr.bf16.mxu0 0
      %2700 = vmatmul.mubr.bf16.gmra.mxu0 %v2538
      %v2701 = vpop.f32.mrf.mxu0
      %v2702 = vadd.f32 %v2569, %v2701
      %v2703 = vpop.f32.mrf.mxu0
      %v2704 = vpop.f32.mrf.mxu0
      %v2705 = vadd.f32 %v2569, %v2704
      %v2706 = vpop.f32.mrf.mxu0
      %2707 = vmatprep.mubr.bf16.mxu0 0
      %2708 = vmatmul.mubr.bf16.gmra.mxu0 %v2539
      %v2709 = vpop.f32.mrf.mxu0
      %v2710 = vadd.f32 %v2569, %v2709
      %v2711 = vpop.f32.mrf.mxu0
      %v2712 = vpop.f32.mrf.mxu0
      %v2713 = vadd.f32 %v2569, %v2712
      %v2714 = vpop.f32.mrf.mxu0
      %2715 = vmatprep.mubr.bf16.mxu0 0
      %2716 = vmatmul.mubr.bf16.gmra.mxu0 %v2540
      %v2717 = vpop.f32.mrf.mxu0
      %v2718 = vadd.f32 %v2569, %v2717
      %v2719 = vpop.f32.mrf.mxu0
      %v2720 = vpop.f32.mrf.mxu0
      %v2721 = vadd.f32 %v2569, %v2720
      %v2722 = vpop.f32.mrf.mxu0
      %2723 = vmatprep.mubr.bf16.mxu0 0
      %2724 = vmatmul.mubr.bf16.gmra.mxu0 %v2541
      %v2725 = vpop.f32.mrf.mxu0
      %v2726 = vadd.f32 %v2569, %v2725
      %v2727 = vpop.f32.mrf.mxu0
      %v2728 = vpop.f32.mrf.mxu0
      %v2729 = vadd.f32 %v2569, %v2728
      %v2730 = vpop.f32.mrf.mxu0
      %2731 = vmatprep.mubr.bf16.mxu0 0
      %2732 = vmatmul.mubr.bf16.gmra.mxu0 %v2542
      %v2733 = vpop.f32.mrf.mxu0
      %v2734 = vadd.f32 %v2569, %v2733
      %v2735 = vpop.f32.mrf.mxu0
      %v2736 = vpop.f32.mrf.mxu0
      %v2737 = vadd.f32 %v2569, %v2736
      %v2738 = vpop.f32.mrf.mxu0
      %2739 = vmatprep.mubr.bf16.mxu0 0
      %2740 = vmatmul.mubr.bf16.gmra.mxu0 %v2543
      %v2741 = vpop.f32.mrf.mxu0
      %v2742 = vadd.f32 %v2569, %v2741
      %v2743 = vpop.f32.mrf.mxu0
      %v2744 = vpop.f32.mrf.mxu0
      %v2745 = vadd.f32 %v2569, %v2744
      %v2746 = vpop.f32.mrf.mxu0
      %2747 = vmatprep.mubr.bf16.mxu0 0
      %2748 = vmatmul.mubr.bf16.gmra.mxu0 %v2544
      %v2749 = vpop.f32.mrf.mxu0
      %v2750 = vadd.f32 %v2569, %v2749
      %v2751 = vpop.f32.mrf.mxu0
      %v2752 = vpop.f32.mrf.mxu0
      %v2753 = vadd.f32 %v2569, %v2752
      %v2754 = vpop.f32.mrf.mxu0
      %2755 = vmatprep.mubr.bf16.mxu0 0
      %2756 = vmatmul.mubr.bf16.gmra.mxu0 %v2545
      %v2757 = vpop.f32.mrf.mxu0
      %v2758 = vadd.f32 %v2569, %v2757
      %v2759 = vpop.f32.mrf.mxu0
      %v2760 = vpop.f32.mrf.mxu0
      %v2761 = vadd.f32 %v2569, %v2760
      %v2762 = vpop.f32.mrf.mxu0
      %2763 = vmatprep.mubr.bf16.mxu0 0
      %2764 = vmatmul.mubr.bf16.gmra.mxu0 %v2546
      %v2765 = vpop.f32.mrf.mxu0
      %v2766 = vadd.f32 %v2569, %v2765
      %v2767 = vpop.f32.mrf.mxu0
      %v2768 = vpop.f32.mrf.mxu0
      %v2769 = vadd.f32 %v2569, %v2768
      %v2770 = vpop.f32.mrf.mxu0
      %2771 = vmatprep.mubr.bf16.mxu0 0
      %2772 = vmatmul.mubr.bf16.gmra.mxu0 %v2547
      %v2773 = vpop.f32.mrf.mxu0
      %v2774 = vadd.f32 %v2569, %v2773
      %v2775 = vpop.f32.mrf.mxu0
      %v2776 = vpop.f32.mrf.mxu0
      %v2777 = vadd.f32 %v2569, %v2776
      %v2778 = vpop.f32.mrf.mxu0
      %2779 = vdwg.mxu0
      %v2780 = vadd.f32 %v2654, %v280
      %v2781 = vadd.f32 %v2657, %v281
      %v2782 = vadd.f32 %v2662, %v282
      %v2783 = vadd.f32 %v2665, %v283
      %v2784 = vadd.f32 %v2670, %v284
      %v2785 = vadd.f32 %v2673, %v285
      %v2786 = vadd.f32 %v2678, %v286
      %v2787 = vadd.f32 %v2681, %v287
      %v2788 = vadd.f32 %v2686, %v288
      %v2789 = vadd.f32 %v2689, %v289
      %v2790 = vadd.f32 %v2694, %v290
      %v2791 = vadd.f32 %v2697, %v291
      %v2792 = vadd.f32 %v2702, %v292
      %v2793 = vadd.f32 %v2705, %v293
      %v2794 = vadd.f32 %v2710, %v294
      %v2795 = vadd.f32 %v2713, %v295
      %v2796 = vadd.f32 %v2718, %v296
      %v2797 = vadd.f32 %v2721, %v297
      %v2798 = vadd.f32 %v2726, %v298
      %v2799 = vadd.f32 %v2729, %v299
      %v2800 = vadd.f32 %v2734, %v300
      %v2801 = vadd.f32 %v2737, %v301
      %v2802 = vadd.f32 %v2742, %v302
      %v2803 = vadd.f32 %v2745, %v303
      %v2804 = vadd.f32 %v2750, %v304
      %v2805 = vadd.f32 %v2753, %v305
      %v2806 = vadd.f32 %v2758, %v306
      %v2807 = vadd.f32 %v2761, %v307
      %v2808 = vadd.f32 %v2766, %v308
      %v2809 = vadd.f32 %v2769, %v309
      %v2810 = vadd.f32 %v2774, %v310
      %v2811 = vadd.f32 %v2777, %v311
      %v2812 = vmax.f32 %v2780, 0.0
      %v2813 = vmax.f32 %v2781, 0.0
      %v2814 = vmax.f32 %v2782, 0.0
      %v2815 = vmax.f32 %v2783, 0.0
      %v2816 = vmax.f32 %v2784, 0.0
      %v2817 = vmax.f32 %v2785, 0.0
      %v2818 = vmax.f32 %v2786, 0.0
      %v2819 = vmax.f32 %v2787, 0.0
      %v2820 = vmax.f32 %v2788, 0.0
      %v2821 = vmax.f32 %v2789, 0.0
      %v2822 = vmax.f32 %v2790, 0.0
      %v2823 = vmax.f32 %v2791, 0.0
      %v2824 = vmax.f32 %v2792, 0.0
      %v2825 = vmax.f32 %v2793, 0.0
      %v2826 = vmax.f32 %v2794, 0.0
      %v2827 = vmax.f32 %v2795, 0.0
      %v2828 = vmax.f32 %v2796, 0.0
      %v2829 = vmax.f32 %v2797, 0.0
      %v2830 = vmax.f32 %v2798, 0.0
      %v2831 = vmax.f32 %v2799, 0.0
      %v2832 = vmax.f32 %v2800, 0.0
      %v2833 = vmax.f32 %v2801, 0.0
      %v2834 = vmax.f32 %v2802, 0.0
      %v2835 = vmax.f32 %v2803, 0.0
      %v2836 = vmax.f32 %v2804, 0.0
      %v2837 = vmax.f32 %v2805, 0.0
      %v2838 = vmax.f32 %v2806, 0.0
      %v2839 = vmax.f32 %v2807, 0.0
      %v2840 = vmax.f32 %v2808, 0.0
      %v2841 = vmax.f32 %v2809, 0.0
      %v2842 = vmax.f32 %v2810, 0.0
      %v2843 = vmax.f32 %v2811, 0.0
      %2844 = vst [vmem:[%s278] sm:$0xff] %v2812
      %2845 = vst [vmem:[%s278 + $0x8] sm:$0xff] %v2813
      %2846 = vst [vmem:[%s278 + $0x10] sm:$0xff] %v2814
      %2847 = vst [vmem:[%s278 + $0x18] sm:$0xff] %v2815
      %2848 = vst [vmem:[%s278 + $0x20] sm:$0xff] %v2816
      %2849 = vst [vmem:[%s278 + $0x28] sm:$0xff] %v2817
      %2850 = vst [vmem:[%s278 + $0x30] sm:$0xff] %v2818
      %2851 = vst [vmem:[%s278 + $0x38] sm:$0xff] %v2819
      %2852 = vst [vmem:[%s278 + $0x40] sm:$0xff] %v2820
      %2853 = vst [vmem:[%s278 + $0x48] sm:$0xff] %v2821
      %2854 = vst [vmem:[%s278 + $0x50] sm:$0xff] %v2822
      %2855 = vst [vmem:[%s278 + $0x58] sm:$0xff] %v2823
      %2856 = vst [vmem:[%s278 + $0x60] sm:$0xff] %v2824
      %2857 = vst [vmem:[%s278 + $0x68] sm:$0xff] %v2825
      %2858 = vst [vmem:[%s278 + $0x70] sm:$0xff] %v2826
      %2859 = vst [vmem:[%s278 + $0x78] sm:$0xff] %v2827
      %2860 = vst [vmem:[%s278 + $0x80] sm:$0xff] %v2828
      %2861 = vst [vmem:[%s278 + $0x88] sm:$0xff] %v2829
      %2862 = vst [vmem:[%s278 + $0x90] sm:$0xff] %v2830
      %2863 = vst [vmem:[%s278 + $0x98] sm:$0xff] %v2831
      %2864 = vst [vmem:[%s278 + $0xa0] sm:$0xff] %v2832
      %2865 = vst [vmem:[%s278 + $0xa8] sm:$0xff] %v2833
      %2866 = vst [vmem:[%s278 + $0xb0] sm:$0xff] %v2834
      %2867 = vst [vmem:[%s278 + $0xb8] sm:$0xff] %v2835
      %2868 = vst [vmem:[%s278 + $0xc0] sm:$0xff] %v2836
      %2869 = vst [vmem:[%s278 + $0xc8] sm:$0xff] %v2837
      %2870 = vst [vmem:[%s278 + $0xd0] sm:$0xff] %v2838
      %2871 = vst [vmem:[%s278 + $0xd8] sm:$0xff] %v2839
      %2872 = vst [vmem:[%s278 + $0xe0] sm:$0xff] %v2840
      %2873 = vst [vmem:[%s278 + $0xe8] sm:$0xff] %v2841
      %2874 = vst [vmem:[%s278 + $0xf0] sm:$0xff] %v2842
      %2875 = vst [vmem:[%s278 + $0xf8] sm:$0xff] %v2843
      %p2876 = scmp.lt.s32.totalorder %s18, 1
      %s2877 = scalar_select %p2876, %s18, 1
      %s2878 = smul.addr %s2877, 32
      %s2879 = smul.addr %s2878, 8
      %s2880 = scalar_lea.vmem %s7, %s2879
      // Predicated region
      $region49: #{_lambda_.1} parent=47 // pred_check
        %p2881 = pneg %p188
      $region50: #{_lambda_.1} parent=47 // pred_check_branch
        %2883 = sbr.rel (%p2881) target = $region52
      $region51: #{_lambda_.1} parent=47 // pred_region
        _
      $region52: #{_lambda_.1} parent=47 // pred_fallthru
        _
    $region48: #{_lambda_.1} parent=5 // pred_fallthru
      _
    %p2884 = scmp.le.s32.totalorder 2, %s13
    // Predicated region
    $region53: #{_lambda_.1} parent=5 // pred_check
      %p2885 = pneg %p2884
    $region54: #{_lambda_.1} parent=5 // pred_check_branch
      %2887 = sbr.rel (%p2885) target = $region56
    $region55: #{_lambda_.1} parent=5 // pred_region
      %s2888 = ssub.s32 %s13, 2
      // Predicated region
      $region57: #{_lambda_.1} parent=55 // pred_check
        %p2889 = pneg %p194
      $region58: #{_lambda_.1} parent=55 // pred_check_branch
        %2891 = sbr.rel (%p2889) target = $region60
      $region59: #{_lambda_.1} parent=55 // pred_region
        %p2892 = scmp.lt.s32.totalorder %s19, 1
        %s2893 = scalar_select %p2892, %s19, 1
        %s2894 = smul.addr %s2893, 32
        %s2895 = smul.addr %s2894, 8
        %s2896 = scalar_lea.vmem %s7, %s2895
      $region60: #{_lambda_.1} parent=55 // pred_fallthru
        _
    $region56: #{_lambda_.1} parent=5 // pred_fallthru
      _
  $region6: #{_lambda_.1} parent=0 // loop_footer
    %s17 = sadd.s32 1, %s13
  $region7: #{_lambda_.1} parent=0 // loop_footer_branch
    %12 = sbr.rel target = $region3
  $region8: #{_lambda_.1} parent=0 // loop_exit
    _

</llo_original>
